<compile_context>
chip_gen: v7x
topology: tpu7x:2x2x1
jax: 0.10.0
libtpu: 0.0.40
codegen_flags: <defaults>
</compile_context>

<pallas_src>
import math

import jax
import jax.numpy as jnp
from jax.experimental import pallas as pl
from jax.experimental.pallas import tpu as pltpu


def _round_up(x: int, m: int) -> int:
    return (x + m - 1) // m * m


def _cores_per_chip() -> int:
    """TensorCores per chip: 2 on v7x-class parts, 1 on v5e/v6e."""
    try:
        kind = jax.devices()[0].device_kind.lower()
    except Exception:
        return 1
    return 2 if "v7" in kind else 1


def _make_kernel(n_layers: int, compute_dtype):
    """Kernel for a fixed (static) number of Linear layers, batch on lanes."""

    def kernel(x_ref, bmat_ref, wcos_ref, wsin_ref, *rest):
        out_ref = rest[-1]
        params = rest[:-1]          # (b0, W1^T, b1, W2^T, b2, ...)

        x = x_ref[...]              # (num_inputs, TM) -- batch on the lane axis

        # Fourier encode on the MXU: the binding slot in this kernel is the
        # VALU (cos/sin polynomials), while the MXU push slot is nearly idle,
        # so this K=num_inputs matmul is essentially free.  pi is already
        # folded into bmat host-side.
        enc = jnp.dot(bmat_ref[...], x,
                      preferred_element_type=jnp.float32)   # (F, TM)

        # cos/sin in compute_dtype: f32 by default; bf16 when use_bf16=True
        # (v6e/v7x bf16 VPU packs 2x elements per vreg, halving the dominant
        # elementwise work -- at reduced accuracy).
        enc = enc.astype(compute_dtype)
        cos_e = jnp.cos(enc)
        sin_e = jnp.sin(enc)

        # First Linear layer: split cos/sin halves (no lane-axis concat);
        # a_values are folded into wcos/wsin host-side.  f32 accumulation.
        h = jnp.dot(wcos_ref[...].astype(compute_dtype), cos_e,
                    preferred_element_type=jnp.float32)
        h = h + jnp.dot(wsin_ref[...].astype(compute_dtype), sin_e,
                        preferred_element_type=jnp.float32)
        h = h + params[0][...]                              # (H0, 1) broadcast
        if n_layers > 1:
            h = jnp.maximum(h, 0.0)

        # Remaining Linear layers (ReLU on all but the last).
        for i in range(1, n_layers):
            w = params[2 * i - 1][...].astype(compute_dtype)   # (out, in)
            b = params[2 * i][...]                             # (out, 1)
            h = jnp.dot(w, h.astype(compute_dtype),
                        preferred_element_type=jnp.float32) + b
            if i < n_layers - 1:
                h = jnp.maximum(h, 0.0)

        out_ref[...] = h.astype(out_ref.dtype)

    return kernel


def _choose_tile(n: int, tile_m: int, cores: int, row_f32_footprint: int):
    """Pick the batch tile (lane axis), padded batch, and grid length."""
    n128 = _round_up(max(n, 1), 128)
    tm = min(_round_up(tile_m, 128), n128)

    # Keep per-step intermediates comfortably inside the default scoped-VMEM
    # budget (16 MiB on v5e, 32 MiB on v6e/v7x); the batch tile dominates.
    budget_bytes = 12 * 1024 * 1024
    max_tm = max(128, (budget_bytes // max(4 * row_f32_footprint, 1)) // 128 * 128)
    tm = min(tm, max_tm)

    if cores > 1:
        # v7x megacore: aim for an even grid with >= 2 pipelined steps per
        # TensorCore.  On single-TC v5e/v6e the grid is a sequential loop, so
        # never force a split there (it only adds per-step overhead).
        min_steps = 2 * cores
        blocks = n128 // 128
        if blocks >= min_steps:
            tm = min(tm, 128 * (blocks // min_steps))

    n_pad = _round_up(n, tm)
    grid = n_pad // tm
    if cores > 1 and grid > 1 and grid % cores != 0:
        grid += cores - (grid % cores)      # even grid: no idle core on the tail
        n_pad = grid * tm
    return tm, n_pad, grid


def fourier_feature_mlp(inputs, a_values, b_values, weights, biases,
                        *, tile_m=8192, use_bf16=False):
    """FourierFeatureMLP forward via pallas_call.

    Args:
      inputs:   (N, num_inputs) f32
      a_values: (F,) f32
      b_values: (num_inputs, F) f32
      weights:  list of (in, out) f32 matrices (hidden layers + output layer)
      biases:   list of (out,) f32 vectors
      tile_m:   batch tile size (rows mapped to the lane axis); sweep 4096-16384
      use_bf16: evaluate cos/sin and the matmul operands in bf16 (f32 accumulate).
                v6e/v7x option; reduces accuracy -- keep False for f32 parity.
    Returns:
      (N, num_outputs) f32
    """
    if b_values is None:
        # TODO(synk): identity-encoding (b_values is None) branch not implemented.
        raise NotImplementedError("b_values=None (identity encoding) path")

    n, num_inputs = inputs.shape
    f = b_values.shape[1]
    assert b_values.shape[0] == num_inputs
    assert a_values.shape[0] == f
    assert weights[0].shape[0] == 2 * f
    h0 = weights[0].shape[1]
    num_outputs = weights[-1].shape[1]
    n_layers = len(weights)

    # ---- host-side constant folding -------------------------------------
    bmat_t = (math.pi * b_values).T                      # (F, num_inputs)
    w0 = weights[0]                                      # (2F, H0)
    w_cos_t = (a_values[:, None] * w0[:f, :]).T          # (H0, F)  a folded in
    w_sin_t = (a_values[:, None] * w0[f:, :]).T          # (H0, F)
    tail_params = [biases[0].reshape(-1, 1)]             # (H0, 1)
    for w, b in zip(weights[1:], biases[1:]):
        tail_params.append(w.T)                          # (out, in)
        tail_params.append(b.reshape(-1, 1))             # (out, 1)

    # ---- choose batch tile (lane axis), generation-aware ------------------
    cores = _cores_per_chip()
    max_h = max(w.shape[1] for w in weights)
    row_f32 = (num_inputs + 3 * f + 2 * max_h
               + 2 * (num_inputs + num_outputs))         # + double-buffered I/O
    tm, n_pad, grid = _choose_tile(n, tile_m, cores, row_f32)

    # Batch-on-lanes layout keeps every in-kernel op lane-dense.
    x_t = inputs.T                                       # (num_inputs, N)
    if n_pad != n:
        x_t = jnp.pad(x_t, ((0, 0), (0, n_pad - n)))

    compute_dtype = jnp.bfloat16 if use_bf16 else jnp.float32
    kernel = _make_kernel(n_layers, compute_dtype)

    def full2d(arr):
        return pl.BlockSpec(arr.shape, lambda i: (0, 0))

    operands = [x_t, bmat_t, w_cos_t, w_sin_t] + tail_params
    in_specs = [pl.BlockSpec((num_inputs, tm), lambda i: (0, i)),
                full2d(bmat_t), full2d(w_cos_t), full2d(w_sin_t)]
    in_specs += [full2d(p) for p in tail_params]
    out_spec = pl.BlockSpec((num_outputs, tm), lambda i: (0, i))

    # Advisory cost estimate so XLA overlaps the wrapper relayouts with the kernel.
    flops = 2 * n_pad * (f * num_inputs + 2 * f * h0
                         + sum(w.shape[0] * w.shape[1] for w in weights[1:]))
    param_bytes = sum(int(p.size) * 4
                      for p in [bmat_t, w_cos_t, w_sin_t] + tail_params)
    cost = pl.CostEstimate(
        flops=int(flops),
        transcendentals=int(2 * n_pad * f),
        bytes_accessed=int(n_pad * (num_inputs + num_outputs) * 4 + param_bytes))

    out_t = pl.pallas_call(
        kernel,
        out_shape=jax.ShapeDtypeStruct((num_outputs, n_pad), jnp.float32),
        grid_spec=pltpu.PrefetchScalarGridSpec(
            num_scalar_prefetch=0,
            grid=(grid,),
            in_specs=in_specs,
            out_specs=out_spec),
        compiler_params=pltpu.CompilerParams(
            dimension_semantics=("parallel",)),
        cost_estimate=cost,
    )(*operands)

    return out_t[:, :n].T                                # (N, num_outputs)


def reference_forward(inputs, a_values, b_values, weights, biases):
    enc = math.pi * inputs @ b_values
    h = jnp.concatenate([a_values * jnp.cos(enc), a_values * jnp.sin(enc)],
                        axis=-1)
    for i, (w, b) in enumerate(zip(weights, biases)):
        h = h @ w + b
        if i < len(weights) - 1:
            h = jnp.maximum(h, 0.0)
    return h


if __name__ == "__main__":
    key = jax.random.PRNGKey(0)

    # Module configuration (small, consistent with the PyTorch __init__):
    num_inputs = 3          # e.g. xyz coordinates
    num_fourier = 16        # b_values: (3, 16) -> encoded dim = 32
    layer_channels = [32, 32]
    num_outputs = 4
    batch = 250             # deliberately not a multiple of 128 (tests padding)

    keys = jax.random.split(key, 16)
    inputs = jax.random.normal(keys[0], (batch, num_inputs), dtype=jnp.float32)
    a_values = jax.random.uniform(keys[1], (num_fourier,),
                                  minval=0.5, maxval=1.5, dtype=jnp.float32)
    b_values = jax.random.normal(keys[2], (num_inputs, num_fourier),
                                 dtype=jnp.float32)

    # Deterministic Linear parameters (weights stored as (in, out)).
    dims = [2 * num_fourier] + layer_channels + [num_outputs]
    weights, biases = [], []
    for li in range(len(dims) - 1):
        fan_in, fan_out = dims[li], dims[li + 1]
        bound = 1.0 / math.sqrt(fan_in)
        w = jax.random.uniform(keys[3 + 2 * li], (fan_in, fan_out),
                               minval=-bound, maxval=bound, dtype=jnp.float32)
        b = jax.random.uniform(keys[4 + 2 * li], (fan_out,),
                               minval=-bound, maxval=bound, dtype=jnp.float32)
        weights.append(w)
        biases.append(b)

    out = fourier_feature_mlp(inputs, a_values, b_values, weights, biases)
    out = jax.block_until_ready(out)

    ref = reference_forward(inputs, a_values, b_values, weights, biases)
    assert out.shape == (batch, num_outputs)
    assert jnp.allclose(out, ref, atol=5e-4, rtol=1e-3), "mismatch vs reference"

    print("KERNEL_OK")
</pallas_src>

<mosaic_0001>
module attributes {stable_mosaic.version = 11 : i64} {
  func.func @kernel(%arg0: i32, %arg1: memref<3x256xf32, #tpu.memory_space<vmem>>, %arg2: memref<16x3xf32, #tpu.memory_space<vmem>>, %arg3: memref<32x16xf32, #tpu.memory_space<vmem>>, %arg4: memref<32x16xf32, #tpu.memory_space<vmem>>, %arg5: memref<32x1xf32, #tpu.memory_space<vmem>>, %arg6: memref<32x32xf32, #tpu.memory_space<vmem>>, %arg7: memref<32x1xf32, #tpu.memory_space<vmem>>, %arg8: memref<4x32xf32, #tpu.memory_space<vmem>>, %arg9: memref<4x1xf32, #tpu.memory_space<vmem>>, %arg10: memref<4x256xf32, #tpu.memory_space<vmem>>) attributes {dimension_semantics = [#tpu.dimension_semantics<parallel>], iteration_bounds = array<i64: 1>, scalar_prefetch = 0 : i64, scratch_operands = 0 : i64, tpu.core_type = #tpu.core_type<tc>, window_params = [{transform_indices = @transform_0, window_bounds = array<i64: 3, 256>}, {pipeline_mode = #tpu.pipeline_mode<synchronous>, transform_indices = @transform_1, window_bounds = array<i64: 16, 3>}, {pipeline_mode = #tpu.pipeline_mode<synchronous>, transform_indices = @transform_2, window_bounds = array<i64: 32, 16>}, {pipeline_mode = #tpu.pipeline_mode<synchronous>, transform_indices = @transform_3, window_bounds = array<i64: 32, 16>}, {pipeline_mode = #tpu.pipeline_mode<synchronous>, transform_indices = @transform_4, window_bounds = array<i64: 32, 1>}, {pipeline_mode = #tpu.pipeline_mode<synchronous>, transform_indices = @transform_5, window_bounds = array<i64: 32, 32>}, {pipeline_mode = #tpu.pipeline_mode<synchronous>, transform_indices = @transform_6, window_bounds = array<i64: 32, 1>}, {pipeline_mode = #tpu.pipeline_mode<synchronous>, transform_indices = @transform_7, window_bounds = array<i64: 4, 32>}, {pipeline_mode = #tpu.pipeline_mode<synchronous>, transform_indices = @transform_8, window_bounds = array<i64: 4, 1>}, {transform_indices = @transform_9, window_bounds = array<i64: 4, 256>}]} {
    %c0 = arith.constant 0 : index
    %c0_0 = arith.constant 0 : index
    %0 = vector.load %arg1[%c0, %c0_0] : memref<3x256xf32, #tpu.memory_space<vmem>>, vector<3x256xf32>
    %c0_1 = arith.constant 0 : index
    %c0_2 = arith.constant 0 : index
    %1 = vector.load %arg2[%c0_1, %c0_2] : memref<16x3xf32, #tpu.memory_space<vmem>>, vector<16x3xf32>
    %cst = arith.constant dense<0.000000e+00> : vector<16x256xf32>
    %2 = tpu.matmul %1, %0, %cst {dimension_numbers = #tpu.dot_dimension_numbers<[1], [0], [0], [1], [0, 0, 1, 1], [], []>} : vector<16x3xf32>, vector<3x256xf32>, vector<16x256xf32> -> vector<16x256xf32>
    %3 = math.cos %2 : vector<16x256xf32>
    %4 = math.sin %2 : vector<16x256xf32>
    %c0_3 = arith.constant 0 : index
    %c0_4 = arith.constant 0 : index
    %5 = vector.load %arg3[%c0_3, %c0_4] : memref<32x16xf32, #tpu.memory_space<vmem>>, vector<32x16xf32>
    %cst_5 = arith.constant dense<0.000000e+00> : vector<32x256xf32>
    %6 = tpu.matmul %5, %3, %cst_5 {dimension_numbers = #tpu.dot_dimension_numbers<[1], [0], [0], [1], [0, 0, 1, 1], [], []>} : vector<32x16xf32>, vector<16x256xf32>, vector<32x256xf32> -> vector<32x256xf32>
    %c0_6 = arith.constant 0 : index
    %c0_7 = arith.constant 0 : index
    %7 = vector.load %arg4[%c0_6, %c0_7] : memref<32x16xf32, #tpu.memory_space<vmem>>, vector<32x16xf32>
    %cst_8 = arith.constant dense<0.000000e+00> : vector<32x256xf32>
    %8 = tpu.matmul %7, %4, %cst_8 {dimension_numbers = #tpu.dot_dimension_numbers<[1], [0], [0], [1], [0, 0, 1, 1], [], []>} : vector<32x16xf32>, vector<16x256xf32>, vector<32x256xf32> -> vector<32x256xf32>
    %9 = arith.addf %6, %8 : vector<32x256xf32>
    %c0_9 = arith.constant 0 : index
    %c0_10 = arith.constant 0 : index
    %10 = vector.load %arg5[%c0_9, %c0_10] : memref<32x1xf32, #tpu.memory_space<vmem>>, vector<32x1xf32>
    %11 = vector.broadcast %10 : vector<32x1xf32> to vector<32x256xf32>
    %12 = arith.addf %9, %11 : vector<32x256xf32>
    %cst_11 = arith.constant 0.000000e+00 : f32
    %13 = vector.broadcast %cst_11 : f32 to vector<32x256xf32>
    %14 = arith.maximumf %12, %13 : vector<32x256xf32>
    %c0_12 = arith.constant 0 : index
    %c0_13 = arith.constant 0 : index
    %15 = vector.load %arg6[%c0_12, %c0_13] : memref<32x32xf32, #tpu.memory_space<vmem>>, vector<32x32xf32>
    %c0_14 = arith.constant 0 : index
    %c0_15 = arith.constant 0 : index
    %16 = vector.load %arg7[%c0_14, %c0_15] : memref<32x1xf32, #tpu.memory_space<vmem>>, vector<32x1xf32>
    %cst_16 = arith.constant dense<0.000000e+00> : vector<32x256xf32>
    %17 = tpu.matmul %15, %14, %cst_16 {dimension_numbers = #tpu.dot_dimension_numbers<[1], [0], [0], [1], [0, 0, 1, 1], [], []>} : vector<32x32xf32>, vector<32x256xf32>, vector<32x256xf32> -> vector<32x256xf32>
    %18 = vector.broadcast %16 : vector<32x1xf32> to vector<32x256xf32>
    %19 = arith.addf %17, %18 : vector<32x256xf32>
    %cst_17 = arith.constant 0.000000e+00 : f32
    %20 = vector.broadcast %cst_17 : f32 to vector<32x256xf32>
    %21 = arith.maximumf %19, %20 : vector<32x256xf32>
    %c0_18 = arith.constant 0 : index
    %c0_19 = arith.constant 0 : index
    %22 = vector.load %arg8[%c0_18, %c0_19] : memref<4x32xf32, #tpu.memory_space<vmem>>, vector<4x32xf32>
    %c0_20 = arith.constant 0 : index
    %c0_21 = arith.constant 0 : index
    %23 = vector.load %arg9[%c0_20, %c0_21] : memref<4x1xf32, #tpu.memory_space<vmem>>, vector<4x1xf32>
    %cst_22 = arith.constant dense<0.000000e+00> : vector<4x256xf32>
    %24 = tpu.matmul %22, %21, %cst_22 {dimension_numbers = #tpu.dot_dimension_numbers<[1], [0], [0], [1], [0, 0, 1, 1], [], []>} : vector<4x32xf32>, vector<32x256xf32>, vector<4x256xf32> -> vector<4x256xf32>
    %25 = vector.broadcast %23 : vector<4x1xf32> to vector<4x256xf32>
    %26 = arith.addf %24, %25 : vector<4x256xf32>
    %c0_23 = arith.constant 0 : index
    %c0_24 = arith.constant 0 : index
    %27 = vector.load %arg10[%c0_23, %c0_24] : memref<4x256xf32, #tpu.memory_space<vmem>>, vector<4x256xf32>
    tpu.vector_store %arg10[%c0_23, %c0_24], %26 {strides = array<i32>} : memref<4x256xf32, #tpu.memory_space<vmem>>, vector<4x256xf32>,
    return
  }
  func.func @transform_0(%arg0: i32) -> (i32, i32) {
    %c0_i32 = arith.constant 0 : i32
    %c0_i32_0 = arith.constant 0 : i32
    return %c0_i32, %arg0 : i32, i32
  }
  func.func @transform_1(%arg0: i32) -> (i32, i32) {
    %c0_i32 = arith.constant 0 : i32
    %c0_i32_0 = arith.constant 0 : i32
    %c0_i32_1 = arith.constant 0 : i32
    return %c0_i32, %c0_i32_0 : i32, i32
  }
  func.func @transform_2(%arg0: i32) -> (i32, i32) {
    %c0_i32 = arith.constant 0 : i32
    %c0_i32_0 = arith.constant 0 : i32
    %c0_i32_1 = arith.constant 0 : i32
    return %c0_i32, %c0_i32_0 : i32, i32
  }
  func.func @transform_3(%arg0: i32) -> (i32, i32) {
    %c0_i32 = arith.constant 0 : i32
    %c0_i32_0 = arith.constant 0 : i32
    %c0_i32_1 = arith.constant 0 : i32
    return %c0_i32, %c0_i32_0 : i32, i32
  }
  func.func @transform_4(%arg0: i32) -> (i32, i32) {
    %c0_i32 = arith.constant 0 : i32
    %c0_i32_0 = arith.constant 0 : i32
    %c0_i32_1 = arith.constant 0 : i32
    return %c0_i32, %c0_i32_0 : i32, i32
  }
  func.func @transform_5(%arg0: i32) -> (i32, i32) {
    %c0_i32 = arith.constant 0 : i32
    %c0_i32_0 = arith.constant 0 : i32
    %c0_i32_1 = arith.constant 0 : i32
    return %c0_i32, %c0_i32_0 : i32, i32
  }
  func.func @transform_6(%arg0: i32) -> (i32, i32) {
    %c0_i32 = arith.constant 0 : i32
    %c0_i32_0 = arith.constant 0 : i32
    %c0_i32_1 = arith.constant 0 : i32
    return %c0_i32, %c0_i32_0 : i32, i32
  }
  func.func @transform_7(%arg0: i32) -> (i32, i32) {
    %c0_i32 = arith.constant 0 : i32
    %c0_i32_0 = arith.constant 0 : i32
    %c0_i32_1 = arith.constant 0 : i32
    return %c0_i32, %c0_i32_0 : i32, i32
  }
  func.func @transform_8(%arg0: i32) -> (i32, i32) {
    %c0_i32 = arith.constant 0 : i32
    %c0_i32_0 = arith.constant 0 : i32
    %c0_i32_1 = arith.constant 0 : i32
    return %c0_i32, %c0_i32_0 : i32, i32
  }
  func.func @transform_9(%arg0: i32) -> (i32, i32) {
    %c0_i32 = arith.constant 0 : i32
    %c0_i32_0 = arith.constant 0 : i32
    return %c0_i32, %arg0 : i32, i32
  }
}

</mosaic_0001>

<llo_original>
// kernel: tpu_custom_call.1
$region0: #{tpu_custom_call.1}
  #allocation0 [shape = 'u32[]', space=smem, size = 0x4, offset = 0x4, fixed_abs, tag = 'smem constant byte address 0x4 - core index']
  #allocation1 [shape = 'u32[144,128]{1,0:T(1,128)}', space=vmem, size = 0x12000, scoped, tag = 'internal scratch']
  %s0 = inlined_call_operand.vmem [shape: f32[3,256], index: 0, kind: input, shape index: {}]
  %s1 = inlined_call_operand.vmem [shape: f32[16,3], index: 1, kind: input, shape index: {}]
  %s2 = inlined_call_operand.vmem [shape: f32[32,16], index: 2, kind: input, shape index: {}]
  %s3 = inlined_call_operand.vmem [shape: f32[32,16], index: 3, kind: input, shape index: {}]
  %s4 = inlined_call_operand.vmem [shape: f32[32,1], index: 4, kind: input, shape index: {}]
  %s5 = inlined_call_operand.vmem [shape: f32[32,32], index: 5, kind: input, shape index: {}]
  %s6 = inlined_call_operand.vmem [shape: f32[32,1], index: 6, kind: input, shape index: {}]
  %s7 = inlined_call_operand.vmem [shape: f32[4,32], index: 7, kind: input, shape index: {}]
  %s8 = inlined_call_operand.vmem [shape: f32[4,1], index: 8, kind: input, shape index: {}]
  %s9 = inlined_call_operand.hbm [shape: f32[4,256], index: 9, kind: output, shape index: {}]
  %s10 = sld [smem:[#allocation0]]
  $region46: #{tpu_custom_call.1} parent=0
    _
  %s12 = ssub.s32 1, %s10
  %s13 = scalar_select 0, %s12, %s10
  $region1: #{tpu_custom_call.1} parent=0
    #allocation2 [shape = 'u8[4096]{0}', space=vmem, size = 0x1000, scoped, tag = 'output window, operand 0, single buffered']
    #allocation3 [shape = 's32[1]{0}', space=sflag, size = 0x4, scoped, tag = 'scoped memory for tpu_custom_call.1']
    %14 = vsyncpa [#allocation3], 0
    // Predicated region
    $region2: #{tpu_custom_call.1} parent=1 // pred_check
      _
    $region3: #{tpu_custom_call.1} parent=1 // pred_check_branch
      %16 = sbr.rel (0) target = $region5
    $region4: #{tpu_custom_call.1} parent=1 // pred_region
      _
    $region5: #{tpu_custom_call.1} parent=1 // pred_fallthru
      _
    // Predicated region
    $region6: #{tpu_custom_call.1} parent=1 // pred_check
      _
    $region7: #{tpu_custom_call.1} parent=1 // pred_check_branch
      %18 = sbr.rel (0) target = $region9
    $region8: #{tpu_custom_call.1} parent=1 // pred_region
      _
    $region9: #{tpu_custom_call.1} parent=1 // pred_fallthru
      _
    // Predicated region
    $region10: #{tpu_custom_call.1} parent=1 // pred_check
      _
    $region11: #{tpu_custom_call.1} parent=1 // pred_check_branch
      %20 = sbr.rel (0) target = $region13
    $region12: #{tpu_custom_call.1} parent=1 // pred_region
      _
    $region13: #{tpu_custom_call.1} parent=1 // pred_fallthru
      _
    // Predicated region
    $region14: #{tpu_custom_call.1} parent=1 // pred_check
      _
    $region15: #{tpu_custom_call.1} parent=1 // pred_check_branch
      %22 = sbr.rel (0) target = $region17
    $region16: #{tpu_custom_call.1} parent=1 // pred_region
      _
    $region17: #{tpu_custom_call.1} parent=1 // pred_fallthru
      _
    // Predicated region
    $region18: #{tpu_custom_call.1} parent=1 // pred_check
      _
    $region19: #{tpu_custom_call.1} parent=1 // pred_check_branch
      %24 = sbr.rel (0) target = $region21
    $region20: #{tpu_custom_call.1} parent=1 // pred_region
      _
    $region21: #{tpu_custom_call.1} parent=1 // pred_fallthru
      _
    // Predicated region
    $region22: #{tpu_custom_call.1} parent=1 // pred_check
      _
    $region23: #{tpu_custom_call.1} parent=1 // pred_check_branch
      %26 = sbr.rel (0) target = $region25
    $region24: #{tpu_custom_call.1} parent=1 // pred_region
      _
    $region25: #{tpu_custom_call.1} parent=1 // pred_fallthru
      _
    // Predicated region
    $region26: #{tpu_custom_call.1} parent=1 // pred_check
      _
    $region27: #{tpu_custom_call.1} parent=1 // pred_check_branch
      %28 = sbr.rel (0) target = $region29
    $region28: #{tpu_custom_call.1} parent=1 // pred_region
      _
    $region29: #{tpu_custom_call.1} parent=1 // pred_fallthru
      _
    // Predicated region
    $region30: #{tpu_custom_call.1} parent=1 // pred_check
      _
    $region31: #{tpu_custom_call.1} parent=1 // pred_check_branch
      %30 = sbr.rel (0) target = $region33
    $region32: #{tpu_custom_call.1} parent=1 // pred_region
      _
    $region33: #{tpu_custom_call.1} parent=1 // pred_fallthru
      _
    // Predicated region
    $region34: #{tpu_custom_call.1} parent=1 // pred_check
      _
    $region35: #{tpu_custom_call.1} parent=1 // pred_check_branch
      %32 = sbr.rel (0) target = $region37
    $region36: #{tpu_custom_call.1} parent=1 // pred_region
      _
    $region37: #{tpu_custom_call.1} parent=1 // pred_fallthru
      _
    %v33 = vld [vmem:[%s0] sm:$0x77]
    %v34 = vld [vmem:[%s1] sm:$0xff]
    %v35 = vld [vmem:[%s1 + $0x8] sm:$0xff]
    %v37 = vcombine.high %v33, %v33
    %vm38 = vcmask 23552
    %v40 = vsel %vm38, %v34, 0
    %v43 = vsel %vm38, %v35, 0
    %vm45 = vcmask 1042432
    %v46 = vsel %vm45, %v33, 0
    %v48 = vsel %vm45, %v37, 0
    %50 = vmatprep.subr.mxu0 %v48
    %51 = vmatpush1.msra.mxu0 %v46
    %52 = vmatprep.subr.mxu0 0.0
    %53 = vmatpush1.msra.mxu0 0.0
    %54 = vmatprep.subr.mxu0 0.0
    %55 = vmatpush1.msra.mxu0 0.0
    %56 = vmatprep.subr.mxu0 0.0
    %57 = vmatpush1.msra.mxu0 0.0
    %58 = vmatprep.subr.mxu0 0.0
    %59 = vmatpush1.msra.mxu0 0.0
    %60 = vmatprep.subr.mxu0 0.0
    %61 = vmatpush1.msra.mxu0 0.0
    %62 = vmatprep.subr.mxu0 0.0
    %63 = vmatpush1.msra.mxu0 0.0
    %64 = vmatprep.subr.mxu0 0.0
    %65 = vmatpush1.msra.mxu0 0.0
    %66 = vmatprep.subr.mxu0 0.0
    %67 = vmatpush1.msra.mxu0 0.0
    %68 = vmatprep.subr.mxu0 0.0
    %69 = vmatpush1.msra.mxu0 0.0
    %70 = vmatprep.subr.mxu0 0.0
    %71 = vmatpush1.msra.mxu0 0.0
    %72 = vmatprep.subr.mxu0 0.0
    %73 = vmatpush1.msra.mxu0 0.0
    %74 = vmatprep.subr.mxu0 0.0
    %75 = vmatpush1.msra.mxu0 0.0
    %76 = vmatprep.subr.mxu0 0.0
    %77 = vmatpush1.msra.mxu0 0.0
    %78 = vmatprep.subr.mxu0 0.0
    %79 = vmatpush1.msra.mxu0 0.0
    %80 = vmatprep.subr.mxu0 0.0
    %81 = vmatpush1.msra.mxu0 0.0
    %82 = vmatprep.subr.mxu0 0.0
    %83 = vmatpush1.msra.mxu0 0.0
    %84 = vmatprep.subr.mxu0 0.0
    %85 = vmatpush1.msra.mxu0 0.0
    %86 = vmatprep.subr.mxu0 0.0
    %87 = vmatpush1.msra.mxu0 0.0
    %88 = vmatprep.subr.mxu0 0.0
    %89 = vmatpush1.msra.mxu0 0.0
    %90 = vmatprep.subr.mxu0 0.0
    %91 = vmatpush1.msra.mxu0 0.0
    %92 = vmatprep.subr.mxu0 0.0
    %93 = vmatpush1.msra.mxu0 0.0
    %94 = vmatprep.subr.mxu0 0.0
    %95 = vmatpush1.msra.mxu0 0.0
    %96 = vmatprep.subr.mxu0 0.0
    %97 = vmatpush1.msra.mxu0 0.0
    %98 = vmatprep.subr.mxu0 0.0
    %99 = vmatpush1.msra.mxu0 0.0
    %100 = vmatprep.subr.mxu0 0.0
    %101 = vmatpush1.msra.mxu0 0.0
    %102 = vmatprep.subr.mxu0 0.0
    %103 = vmatpush1.msra.mxu0 0.0
    %104 = vmatprep.subr.mxu0 0.0
    %105 = vmatpush1.msra.mxu0 0.0
    %106 = vmatprep.subr.mxu0 0.0
    %107 = vmatpush1.msra.mxu0 0.0
    %108 = vmatprep.subr.mxu0 0.0
    %109 = vmatpush1.msra.mxu0 0.0
    %110 = vmatprep.subr.mxu0 0.0
    %111 = vmatpush1.msra.mxu0 0.0
    %112 = vmatprep.subr.mxu0 0.0
    %113 = vmatpush1.msra.mxu0 0.0
    %114 = vmatprep.mubr.f32.mxu0 0.0
    %115 = vmatmul.mubr.f32.gmra.mrb[0].mxu0 %v40
    %v116 = vpop.f32.mrb[0].mxu0
    %v117 = vadd.f32 0.0, %v116
    %v118 = vpop.f32.mrb[0].mxu0
    %v119 = vadd.f32 0.0, %v118
    %120 = vmatprep.mubr.f32.mxu0 0.0
    %121 = vmatmul.mubr.f32.gmra.mrb[0].mxu0 %v43
    %v122 = vpop.f32.mrb[0].mxu0
    %v123 = vadd.f32 0.0, %v122
    %v124 = vpop.f32.mrb[0].mxu0
    %v125 = vadd.f32 0.0, %v124
    %126 = vdwg.mxu0
    %v127 = vand.u32 2147483647, %v117
    %vm128 = vcmp.le.f32.partialorder %v127, 0.7853982
    %vm129 = vcmp.lt.s32.totalorder %v117, 0
    %v130 = vand.u32 %v117, 2139095040
    %v131 = vshrl.u32 %v130, 23
    %v132 = vsub.s32 %v131, 127
    %v133 = vand.u32 2147483647, %v117
    %v134 = vand.u32 %v133, 8388607
    %v135 = vor.u32 %v134, 8388608
    %v136 = vsub.s32 0, %v135
    %v137 = vadd.s32 %v132, 1
    %vm138 = vcmp.gt.s32.totalorder %v137, 0
    %v139 = vsel %vm138, %v137, 0
    %v140 = vshrl.u32 %v139, 5
    %v141 = vand.u32 %v139, 31
    %v142 = vsub.s32 32, %v141
    %v143 = vshrl.u32 683565275, %v142
    %v144 = vshll.u32 683565275, %v141
    %v145 = vshrl.u32 2475754826, %v142
    %v146 = vor.u32 %v144, %v145
    %v147 = vshll.u32 2475754826, %v141
    %v148 = vshrl.u32 2131351028, %v142
    %v149 = vor.u32 %v147, %v148
    %v150 = vshll.u32 2131351028, %v141
    %v151 = vshrl.u32 2102212464, %v142
    %v152 = vor.u32 %v150, %v151
    %v153 = vshll.u32 2102212464, %v141
    %v154 = vshrl.u32 920167782, %v142
    %v155 = vor.u32 %v153, %v154
    %v156 = vshll.u32 920167782, %v141
    %v157 = vshrl.u32 1326507024, %v142
    %v158 = vor.u32 %v156, %v157
    %vm159 = vcmp.lt.s32.totalorder %v140, 1
    %vm160 = vcmp.lt.s32.totalorder %v140, 2
    %vm161 = vcmp.lt.s32.totalorder %v140, 3
    %vm162 = vcmp.lt.s32.totalorder %v140, 4
    %v163 = vsel %vm159, %v143, %v146
    %v164 = vsel %vm162, %v152, 2102212464
    %v165 = vsel %vm161, %v149, %v164
    %v166 = vsel %vm160, %v163, %v165
    %v167 = vsel %vm159, %v146, %v149
    %v168 = vsel %vm162, %v155, 920167782
    %v169 = vsel %vm161, %v152, %v168
    %v170 = vsel %vm160, %v167, %v169
    %v171 = vsel %vm159, %v149, %v152
    %v172 = vsel %vm162, %v158, 1326507024
    %v173 = vsel %vm161, %v155, %v172
    %v174 = vsel %vm160, %v171, %v173
    %v175 = vshll.u32 %v135, 8
    %v176 = vmul.u32.u64.compose %v175, %v174
    %v177 = vextract.low.u32 %v176
    %v178 = vextract.high.u32 %v176
    %v179 = vmul.u32.u64.compose %v175, %v170
    %v180 = vextract.low.u32 %v179
    %v181 = vextract.high.u32 %v179
    %v182 = vmul.u32 %v175, %v166
    %v183 = vadd.s32 %v178, %v180
    %vm184 = vc.u32 %v178, %v180
    %v185 = vadd.s32 %v181, 1
    %v186 = vsel %vm184, %v185, %v181
    %v187 = vadd.s32 %v182, %v186
    %v188 = vadd.s32 %v187, 536870912
    %v189 = vshrl.u32 %v188, 30
    %v190 = vshll.u32 %v189, 30
    %v191 = vsub.s32 %v187, %v190
    %vm192 = vcmp.lt.s32.totalorder %v191, 0
    %v193 = vsub.s32 0, %v191
    %v194 = vsel %vm192, %v193, %v191
    %v195 = vclz %v194
    %v196 = vsub.s32 %v195, 2
    %vm197 = vcmp.gt.s32.totalorder 0, %v196
    %v198 = vsel %vm197, 0, %v196
    %v199 = vsub.s32 32, %v198
    %v200 = vshll.u32 %v191, %v198
    %v201 = vshrl.u32 %v183, %v199
    %v202 = vor.u32 %v200, %v201
    %v203 = vsub.s32 4294967266, %v198
    %v204 = vadd.s32 %v203, 127
    %v205 = vshll.u32 %v204, 23
    %v206 = vor.u32 4788187, %v205
    %v207 = vand.u32 2147483647, %v206
    %v209 = vcvt.s32.f32 %v202
    %v210 = vmul.f32 %v209, %v207
    %v211 = vxor.u32 %v210, 2147483648
    %v212 = vsel %vm129, %v211, %v210
    %v213 = vsub.s32 4, %v189
    %v214 = vsel %vm129, %v213, %v189
    %v215 = vsel %vm128, %v117, %v212
    %v216 = vsel %vm128, 0, %v214
    %v217 = vcosq.f32.pop %v215
    %v218 = vsinq.f32.pop %v215
    %vm219 = vweird.f32 %v117
    %v220 = vand.u32 %v216, 3
    %vm221 = vcmp.lt.s32.totalorder %v220, 2
    %vm222 = vcmp.eq.s32.totalorder %v220, 0
    %v223 = vxor.u32 %v218, 2147483648
    %v224 = vsel %vm222, %v217, %v223
    %vm225 = vcmp.eq.s32.totalorder %v220, 2
    %v226 = vxor.u32 %v217, 2147483648
    %v227 = vsel %vm225, %v226, %v218
    %v228 = vsel %vm221, %v224, %v227
    %v229 = vsel %vm219, nan, %v228
    %v230 = vand.u32 2147483647, %v119
    %vm231 = vcmp.le.f32.partialorder %v230, 0.7853982
    %vm232 = vcmp.lt.s32.totalorder %v119, 0
    %v233 = vand.u32 %v119, 2139095040
    %v234 = vshrl.u32 %v233, 23
    %v235 = vsub.s32 %v234, 127
    %v236 = vand.u32 2147483647, %v119
    %v237 = vand.u32 %v236, 8388607
    %v238 = vor.u32 %v237, 8388608
    %v239 = vsub.s32 0, %v238
    %v240 = vadd.s32 %v235, 1
    %vm241 = vcmp.gt.s32.totalorder %v240, 0
    %v242 = vsel %vm241, %v240, 0
    %v243 = vshrl.u32 %v242, 5
    %v244 = vand.u32 %v242, 31
    %v245 = vsub.s32 32, %v244
    %v246 = vshrl.u32 683565275, %v245
    %v247 = vshll.u32 683565275, %v244
    %v248 = vshrl.u32 2475754826, %v245
    %v249 = vor.u32 %v247, %v248
    %v250 = vshll.u32 2475754826, %v244
    %v251 = vshrl.u32 2131351028, %v245
    %v252 = vor.u32 %v250, %v251
    %v253 = vshll.u32 2131351028, %v244
    %v254 = vshrl.u32 2102212464, %v245
    %v255 = vor.u32 %v253, %v254
    %v256 = vshll.u32 2102212464, %v244
    %v257 = vshrl.u32 920167782, %v245
    %v258 = vor.u32 %v256, %v257
    %v259 = vshll.u32 920167782, %v244
    %v260 = vshrl.u32 1326507024, %v245
    %v261 = vor.u32 %v259, %v260
    %vm262 = vcmp.lt.s32.totalorder %v243, 1
    %vm263 = vcmp.lt.s32.totalorder %v243, 2
    %vm264 = vcmp.lt.s32.totalorder %v243, 3
    %vm265 = vcmp.lt.s32.totalorder %v243, 4
    %v266 = vsel %vm262, %v246, %v249
    %v267 = vsel %vm265, %v255, 2102212464
    %v268 = vsel %vm264, %v252, %v267
    %v269 = vsel %vm263, %v266, %v268
    %v270 = vsel %vm262, %v249, %v252
    %v271 = vsel %vm265, %v258, 920167782
    %v272 = vsel %vm264, %v255, %v271
    %v273 = vsel %vm263, %v270, %v272
    %v274 = vsel %vm262, %v252, %v255
    %v275 = vsel %vm265, %v261, 1326507024
    %v276 = vsel %vm264, %v258, %v275
    %v277 = vsel %vm263, %v274, %v276
    %v278 = vshll.u32 %v238, 8
    %v279 = vmul.u32.u64.compose %v278, %v277
    %v280 = vextract.low.u32 %v279
    %v281 = vextract.high.u32 %v279
    %v282 = vmul.u32.u64.compose %v278, %v273
    %v283 = vextract.low.u32 %v282
    %v284 = vextract.high.u32 %v282
    %v285 = vmul.u32 %v278, %v269
    %v286 = vadd.s32 %v281, %v283
    %vm287 = vc.u32 %v281, %v283
    %v288 = vadd.s32 %v284, 1
    %v289 = vsel %vm287, %v288, %v284
    %v290 = vadd.s32 %v285, %v289
    %v291 = vadd.s32 %v290, 536870912
    %v292 = vshrl.u32 %v291, 30
    %v293 = vshll.u32 %v292, 30
    %v294 = vsub.s32 %v290, %v293
    %vm295 = vcmp.lt.s32.totalorder %v294, 0
    %v296 = vsub.s32 0, %v294
    %v297 = vsel %vm295, %v296, %v294
    %v298 = vclz %v297
    %v299 = vsub.s32 %v298, 2
    %vm300 = vcmp.gt.s32.totalorder 0, %v299
    %v301 = vsel %vm300, 0, %v299
    %v302 = vsub.s32 32, %v301
    %v303 = vshll.u32 %v294, %v301
    %v304 = vshrl.u32 %v286, %v302
    %v305 = vor.u32 %v303, %v304
    %v306 = vsub.s32 4294967266, %v301
    %v307 = vadd.s32 %v306, 127
    %v308 = vshll.u32 %v307, 23
    %v309 = vor.u32 4788187, %v308
    %v310 = vand.u32 2147483647, %v309
    %v312 = vcvt.s32.f32 %v305
    %v313 = vmul.f32 %v312, %v310
    %v314 = vxor.u32 %v313, 2147483648
    %v315 = vsel %vm232, %v314, %v313
    %v316 = vsub.s32 4, %v292
    %v317 = vsel %vm232, %v316, %v292
    %v318 = vsel %vm231, %v119, %v315
    %v319 = vsel %vm231, 0, %v317
    %v320 = vcosq.f32.pop %v318
    %v321 = vsinq.f32.pop %v318
    %vm322 = vweird.f32 %v119
    %v323 = vand.u32 %v319, 3
    %vm324 = vcmp.lt.s32.totalorder %v323, 2
    %vm325 = vcmp.eq.s32.totalorder %v323, 0
    %v326 = vxor.u32 %v321, 2147483648
    %v327 = vsel %vm325, %v320, %v326
    %vm328 = vcmp.eq.s32.totalorder %v323, 2
    %v329 = vxor.u32 %v320, 2147483648
    %v330 = vsel %vm328, %v329, %v321
    %v331 = vsel %vm324, %v327, %v330
    %v332 = vsel %vm322, nan, %v331
    %v333 = vand.u32 2147483647, %v123
    %vm334 = vcmp.le.f32.partialorder %v333, 0.7853982
    %vm335 = vcmp.lt.s32.totalorder %v123, 0
    %v336 = vand.u32 %v123, 2139095040
    %v337 = vshrl.u32 %v336, 23
    %v338 = vsub.s32 %v337, 127
    %v339 = vand.u32 2147483647, %v123
    %v340 = vand.u32 %v339, 8388607
    %v341 = vor.u32 %v340, 8388608
    %v342 = vsub.s32 0, %v341
    %v343 = vadd.s32 %v338, 1
    %vm344 = vcmp.gt.s32.totalorder %v343, 0
    %v345 = vsel %vm344, %v343, 0
    %v346 = vshrl.u32 %v345, 5
    %v347 = vand.u32 %v345, 31
    %v348 = vsub.s32 32, %v347
    %v349 = vshrl.u32 683565275, %v348
    %v350 = vshll.u32 683565275, %v347
    %v351 = vshrl.u32 2475754826, %v348
    %v352 = vor.u32 %v350, %v351
    %v353 = vshll.u32 2475754826, %v347
    %v354 = vshrl.u32 2131351028, %v348
    %v355 = vor.u32 %v353, %v354
    %v356 = vshll.u32 2131351028, %v347
    %v357 = vshrl.u32 2102212464, %v348
    %v358 = vor.u32 %v356, %v357
    %v359 = vshll.u32 2102212464, %v347
    %v360 = vshrl.u32 920167782, %v348
    %v361 = vor.u32 %v359, %v360
    %v362 = vshll.u32 920167782, %v347
    %v363 = vshrl.u32 1326507024, %v348
    %v364 = vor.u32 %v362, %v363
    %vm365 = vcmp.lt.s32.totalorder %v346, 1
    %vm366 = vcmp.lt.s32.totalorder %v346, 2
    %vm367 = vcmp.lt.s32.totalorder %v346, 3
    %vm368 = vcmp.lt.s32.totalorder %v346, 4
    %v369 = vsel %vm365, %v349, %v352
    %v370 = vsel %vm368, %v358, 2102212464
    %v371 = vsel %vm367, %v355, %v370
    %v372 = vsel %vm366, %v369, %v371
    %v373 = vsel %vm365, %v352, %v355
    %v374 = vsel %vm368, %v361, 920167782
    %v375 = vsel %vm367, %v358, %v374
    %v376 = vsel %vm366, %v373, %v375
    %v377 = vsel %vm365, %v355, %v358
    %v378 = vsel %vm368, %v364, 1326507024
    %v379 = vsel %vm367, %v361, %v378
    %v380 = vsel %vm366, %v377, %v379
    %v381 = vshll.u32 %v341, 8
    %v382 = vmul.u32.u64.compose %v381, %v380
    %v383 = vextract.low.u32 %v382
    %v384 = vextract.high.u32 %v382
    %v385 = vmul.u32.u64.compose %v381, %v376
    %v386 = vextract.low.u32 %v385
    %v387 = vextract.high.u32 %v385
    %v388 = vmul.u32 %v381, %v372
    %v389 = vadd.s32 %v384, %v386
    %vm390 = vc.u32 %v384, %v386
    %v391 = vadd.s32 %v387, 1
    %v392 = vsel %vm390, %v391, %v387
    %v393 = vadd.s32 %v388, %v392
    %v394 = vadd.s32 %v393, 536870912
    %v395 = vshrl.u32 %v394, 30
    %v396 = vshll.u32 %v395, 30
    %v397 = vsub.s32 %v393, %v396
    %vm398 = vcmp.lt.s32.totalorder %v397, 0
    %v399 = vsub.s32 0, %v397
    %v400 = vsel %vm398, %v399, %v397
    %v401 = vclz %v400
    %v402 = vsub.s32 %v401, 2
    %vm403 = vcmp.gt.s32.totalorder 0, %v402
    %v404 = vsel %vm403, 0, %v402
    %v405 = vsub.s32 32, %v404
    %v406 = vshll.u32 %v397, %v404
    %v407 = vshrl.u32 %v389, %v405
    %v408 = vor.u32 %v406, %v407
    %v409 = vsub.s32 4294967266, %v404
    %v410 = vadd.s32 %v409, 127
    %v411 = vshll.u32 %v410, 23
    %v412 = vor.u32 4788187, %v411
    %v413 = vand.u32 2147483647, %v412
    %v415 = vcvt.s32.f32 %v408
    %v416 = vmul.f32 %v415, %v413
    %v417 = vxor.u32 %v416, 2147483648
    %v418 = vsel %vm335, %v417, %v416
    %v419 = vsub.s32 4, %v395
    %v420 = vsel %vm335, %v419, %v395
    %v421 = vsel %vm334, %v123, %v418
    %v422 = vsel %vm334, 0, %v420
    %v423 = vcosq.f32.pop %v421
    %v424 = vsinq.f32.pop %v421
    %vm425 = vweird.f32 %v123
    %v426 = vand.u32 %v422, 3
    %vm427 = vcmp.lt.s32.totalorder %v426, 2
    %vm428 = vcmp.eq.s32.totalorder %v426, 0
    %v429 = vxor.u32 %v424, 2147483648
    %v430 = vsel %vm428, %v423, %v429
    %vm431 = vcmp.eq.s32.totalorder %v426, 2
    %v432 = vxor.u32 %v423, 2147483648
    %v433 = vsel %vm431, %v432, %v424
    %v434 = vsel %vm427, %v430, %v433
    %v435 = vsel %vm425, nan, %v434
    %v436 = vand.u32 2147483647, %v125
    %vm437 = vcmp.le.f32.partialorder %v436, 0.7853982
    %vm438 = vcmp.lt.s32.totalorder %v125, 0
    %v439 = vand.u32 %v125, 2139095040
    %v440 = vshrl.u32 %v439, 23
    %v441 = vsub.s32 %v440, 127
    %v442 = vand.u32 2147483647, %v125
    %v443 = vand.u32 %v442, 8388607
    %v444 = vor.u32 %v443, 8388608
    %v445 = vsub.s32 0, %v444
    %v446 = vadd.s32 %v441, 1
    %vm447 = vcmp.gt.s32.totalorder %v446, 0
    %v448 = vsel %vm447, %v446, 0
    %v449 = vshrl.u32 %v448, 5
    %v450 = vand.u32 %v448, 31
    %v451 = vsub.s32 32, %v450
    %v452 = vshrl.u32 683565275, %v451
    %v453 = vshll.u32 683565275, %v450
    %v454 = vshrl.u32 2475754826, %v451
    %v455 = vor.u32 %v453, %v454
    %v456 = vshll.u32 2475754826, %v450
    %v457 = vshrl.u32 2131351028, %v451
    %v458 = vor.u32 %v456, %v457
    %v459 = vshll.u32 2131351028, %v450
    %v460 = vshrl.u32 2102212464, %v451
    %v461 = vor.u32 %v459, %v460
    %v462 = vshll.u32 2102212464, %v450
    %v463 = vshrl.u32 920167782, %v451
    %v464 = vor.u32 %v462, %v463
    %v465 = vshll.u32 920167782, %v450
    %v466 = vshrl.u32 1326507024, %v451
    %v467 = vor.u32 %v465, %v466
    %vm468 = vcmp.lt.s32.totalorder %v449, 1
    %vm469 = vcmp.lt.s32.totalorder %v449, 2
    %vm470 = vcmp.lt.s32.totalorder %v449, 3
    %vm471 = vcmp.lt.s32.totalorder %v449, 4
    %v472 = vsel %vm468, %v452, %v455
    %v473 = vsel %vm471, %v461, 2102212464
    %v474 = vsel %vm470, %v458, %v473
    %v475 = vsel %vm469, %v472, %v474
    %v476 = vsel %vm468, %v455, %v458
    %v477 = vsel %vm471, %v464, 920167782
    %v478 = vsel %vm470, %v461, %v477
    %v479 = vsel %vm469, %v476, %v478
    %v480 = vsel %vm468, %v458, %v461
    %v481 = vsel %vm471, %v467, 1326507024
    %v482 = vsel %vm470, %v464, %v481
    %v483 = vsel %vm469, %v480, %v482
    %v484 = vshll.u32 %v444, 8
    %v485 = vmul.u32.u64.compose %v484, %v483
    %v486 = vextract.low.u32 %v485
    %v487 = vextract.high.u32 %v485
    %v488 = vmul.u32.u64.compose %v484, %v479
    %v489 = vextract.low.u32 %v488
    %v490 = vextract.high.u32 %v488
    %v491 = vmul.u32 %v484, %v475
    %v492 = vadd.s32 %v487, %v489
    %vm493 = vc.u32 %v487, %v489
    %v494 = vadd.s32 %v490, 1
    %v495 = vsel %vm493, %v494, %v490
    %v496 = vadd.s32 %v491, %v495
    %v497 = vadd.s32 %v496, 536870912
    %v498 = vshrl.u32 %v497, 30
    %v499 = vshll.u32 %v498, 30
    %v500 = vsub.s32 %v496, %v499
    %vm501 = vcmp.lt.s32.totalorder %v500, 0
    %v502 = vsub.s32 0, %v500
    %v503 = vsel %vm501, %v502, %v500
    %v504 = vclz %v503
    %v505 = vsub.s32 %v504, 2
    %vm506 = vcmp.gt.s32.totalorder 0, %v505
    %v507 = vsel %vm506, 0, %v505
    %v508 = vsub.s32 32, %v507
    %v509 = vshll.u32 %v500, %v507
    %v510 = vshrl.u32 %v492, %v508
    %v511 = vor.u32 %v509, %v510
    %v512 = vsub.s32 4294967266, %v507
    %v513 = vadd.s32 %v512, 127
    %v514 = vshll.u32 %v513, 23
    %v515 = vor.u32 4788187, %v514
    %v516 = vand.u32 2147483647, %v515
    %v518 = vcvt.s32.f32 %v511
    %v519 = vmul.f32 %v518, %v516
    %v520 = vxor.u32 %v519, 2147483648
    %v521 = vsel %vm438, %v520, %v519
    %v522 = vsub.s32 4, %v498
    %v523 = vsel %vm438, %v522, %v498
    %v524 = vsel %vm437, %v125, %v521
    %v525 = vsel %vm437, 0, %v523
    %v526 = vcosq.f32.pop %v524
    %v527 = vsinq.f32.pop %v524
    %vm528 = vweird.f32 %v125
    %v529 = vand.u32 %v525, 3
    %vm530 = vcmp.lt.s32.totalorder %v529, 2
    %vm531 = vcmp.eq.s32.totalorder %v529, 0
    %v532 = vxor.u32 %v527, 2147483648
    %v533 = vsel %vm531, %v526, %v532
    %vm534 = vcmp.eq.s32.totalorder %v529, 2
    %v535 = vxor.u32 %v526, 2147483648
    %v536 = vsel %vm534, %v535, %v527
    %v537 = vsel %vm530, %v533, %v536
    %v538 = vsel %vm528, nan, %v537
    %v539 = vand.u32 2147483647, %v117
    %vm540 = vcmp.le.f32.partialorder %v539, 0.7853982
    %vm541 = vcmp.lt.s32.totalorder %v117, 0
    %v542 = vand.u32 %v117, 2139095040
    %v543 = vshrl.u32 %v542, 23
    %v544 = vsub.s32 %v543, 127
    %v545 = vand.u32 2147483647, %v117
    %v546 = vand.u32 %v545, 8388607
    %v547 = vor.u32 %v546, 8388608
    %v548 = vsub.s32 0, %v547
    %v549 = vadd.s32 %v544, 1
    %vm550 = vcmp.gt.s32.totalorder %v549, 0
    %v551 = vsel %vm550, %v549, 0
    %v552 = vshrl.u32 %v551, 5
    %v553 = vand.u32 %v551, 31
    %v554 = vsub.s32 32, %v553
    %v555 = vshrl.u32 683565275, %v554
    %v556 = vshll.u32 683565275, %v553
    %v557 = vshrl.u32 2475754826, %v554
    %v558 = vor.u32 %v556, %v557
    %v559 = vshll.u32 2475754826, %v553
    %v560 = vshrl.u32 2131351028, %v554
    %v561 = vor.u32 %v559, %v560
    %v562 = vshll.u32 2131351028, %v553
    %v563 = vshrl.u32 2102212464, %v554
    %v564 = vor.u32 %v562, %v563
    %v565 = vshll.u32 2102212464, %v553
    %v566 = vshrl.u32 920167782, %v554
    %v567 = vor.u32 %v565, %v566
    %v568 = vshll.u32 920167782, %v553
    %v569 = vshrl.u32 1326507024, %v554
    %v570 = vor.u32 %v568, %v569
    %vm571 = vcmp.lt.s32.totalorder %v552, 1
    %vm572 = vcmp.lt.s32.totalorder %v552, 2
    %vm573 = vcmp.lt.s32.totalorder %v552, 3
    %vm574 = vcmp.lt.s32.totalorder %v552, 4
    %v575 = vsel %vm571, %v555, %v558
    %v576 = vsel %vm574, %v564, 2102212464
    %v577 = vsel %vm573, %v561, %v576
    %v578 = vsel %vm572, %v575, %v577
    %v579 = vsel %vm571, %v558, %v561
    %v580 = vsel %vm574, %v567, 920167782
    %v581 = vsel %vm573, %v564, %v580
    %v582 = vsel %vm572, %v579, %v581
    %v583 = vsel %vm571, %v561, %v564
    %v584 = vsel %vm574, %v570, 1326507024
    %v585 = vsel %vm573, %v567, %v584
    %v586 = vsel %vm572, %v583, %v585
    %v587 = vshll.u32 %v547, 8
    %v588 = vmul.u32.u64.compose %v587, %v586
    %v589 = vextract.low.u32 %v588
    %v590 = vextract.high.u32 %v588
    %v591 = vmul.u32.u64.compose %v587, %v582
    %v592 = vextract.low.u32 %v591
    %v593 = vextract.high.u32 %v591
    %v594 = vmul.u32 %v587, %v578
    %v595 = vadd.s32 %v590, %v592
    %vm596 = vc.u32 %v590, %v592
    %v597 = vadd.s32 %v593, 1
    %v598 = vsel %vm596, %v597, %v593
    %v599 = vadd.s32 %v594, %v598
    %v600 = vadd.s32 %v599, 536870912
    %v601 = vshrl.u32 %v600, 30
    %v602 = vshll.u32 %v601, 30
    %v603 = vsub.s32 %v599, %v602
    %vm604 = vcmp.lt.s32.totalorder %v603, 0
    %v605 = vsub.s32 0, %v603
    %v606 = vsel %vm604, %v605, %v603
    %v607 = vclz %v606
    %v608 = vsub.s32 %v607, 2
    %vm609 = vcmp.gt.s32.totalorder 0, %v608
    %v610 = vsel %vm609, 0, %v608
    %v611 = vsub.s32 32, %v610
    %v612 = vshll.u32 %v603, %v610
    %v613 = vshrl.u32 %v595, %v611
    %v614 = vor.u32 %v612, %v613
    %v615 = vsub.s32 4294967266, %v610
    %v616 = vadd.s32 %v615, 127
    %v617 = vshll.u32 %v616, 23
    %v618 = vor.u32 4788187, %v617
    %v619 = vand.u32 2147483647, %v618
    %v621 = vcvt.s32.f32 %v614
    %v622 = vmul.f32 %v621, %v619
    %v623 = vxor.u32 %v622, 2147483648
    %v624 = vsel %vm541, %v623, %v622
    %v625 = vsub.s32 4, %v601
    %v626 = vsel %vm541, %v625, %v601
    %v627 = vsel %vm540, %v117, %v624
    %v628 = vsel %vm540, 0, %v626
    %v629 = vcosq.f32.pop %v627
    %v630 = vsinq.f32.pop %v627
    %vm631 = vweird.f32 %v117
    %v632 = vadd.s32 %v628, 3
    %v633 = vand.u32 %v632, 3
    %vm634 = vcmp.lt.s32.totalorder %v633, 2
    %vm635 = vcmp.eq.s32.totalorder %v633, 0
    %v636 = vxor.u32 %v630, 2147483648
    %v637 = vsel %vm635, %v629, %v636
    %vm638 = vcmp.eq.s32.totalorder %v633, 2
    %v639 = vxor.u32 %v629, 2147483648
    %v640 = vsel %vm638, %v639, %v630
    %v641 = vsel %vm634, %v637, %v640
    %v642 = vsel %vm631, nan, %v641
    %v643 = vand.u32 2147483647, %v119
    %vm644 = vcmp.le.f32.partialorder %v643, 0.7853982
    %vm645 = vcmp.lt.s32.totalorder %v119, 0
    %v646 = vand.u32 %v119, 2139095040
    %v647 = vshrl.u32 %v646, 23
    %v648 = vsub.s32 %v647, 127
    %v649 = vand.u32 2147483647, %v119
    %v650 = vand.u32 %v649, 8388607
    %v651 = vor.u32 %v650, 8388608
    %v652 = vsub.s32 0, %v651
    %v653 = vadd.s32 %v648, 1
    %vm654 = vcmp.gt.s32.totalorder %v653, 0
    %v655 = vsel %vm654, %v653, 0
    %v656 = vshrl.u32 %v655, 5
    %v657 = vand.u32 %v655, 31
    %v658 = vsub.s32 32, %v657
    %v659 = vshrl.u32 683565275, %v658
    %v660 = vshll.u32 683565275, %v657
    %v661 = vshrl.u32 2475754826, %v658
    %v662 = vor.u32 %v660, %v661
    %v663 = vshll.u32 2475754826, %v657
    %v664 = vshrl.u32 2131351028, %v658
    %v665 = vor.u32 %v663, %v664
    %v666 = vshll.u32 2131351028, %v657
    %v667 = vshrl.u32 2102212464, %v658
    %v668 = vor.u32 %v666, %v667
    %v669 = vshll.u32 2102212464, %v657
    %v670 = vshrl.u32 920167782, %v658
    %v671 = vor.u32 %v669, %v670
    %v672 = vshll.u32 920167782, %v657
    %v673 = vshrl.u32 1326507024, %v658
    %v674 = vor.u32 %v672, %v673
    %vm675 = vcmp.lt.s32.totalorder %v656, 1
    %vm676 = vcmp.lt.s32.totalorder %v656, 2
    %vm677 = vcmp.lt.s32.totalorder %v656, 3
    %vm678 = vcmp.lt.s32.totalorder %v656, 4
    %v679 = vsel %vm675, %v659, %v662
    %v680 = vsel %vm678, %v668, 2102212464
    %v681 = vsel %vm677, %v665, %v680
    %v682 = vsel %vm676, %v679, %v681
    %v683 = vsel %vm675, %v662, %v665
    %v684 = vsel %vm678, %v671, 920167782
    %v685 = vsel %vm677, %v668, %v684
    %v686 = vsel %vm676, %v683, %v685
    %v687 = vsel %vm675, %v665, %v668
    %v688 = vsel %vm678, %v674, 1326507024
    %v689 = vsel %vm677, %v671, %v688
    %v690 = vsel %vm676, %v687, %v689
    %v691 = vshll.u32 %v651, 8
    %v692 = vmul.u32.u64.compose %v691, %v690
    %v693 = vextract.low.u32 %v692
    %v694 = vextract.high.u32 %v692
    %v695 = vmul.u32.u64.compose %v691, %v686
    %v696 = vextract.low.u32 %v695
    %v697 = vextract.high.u32 %v695
    %v698 = vmul.u32 %v691, %v682
    %v699 = vadd.s32 %v694, %v696
    %vm700 = vc.u32 %v694, %v696
    %v701 = vadd.s32 %v697, 1
    %v702 = vsel %vm700, %v701, %v697
    %v703 = vadd.s32 %v698, %v702
    %v704 = vadd.s32 %v703, 536870912
    %v705 = vshrl.u32 %v704, 30
    %v706 = vshll.u32 %v705, 30
    %v707 = vsub.s32 %v703, %v706
    %vm708 = vcmp.lt.s32.totalorder %v707, 0
    %v709 = vsub.s32 0, %v707
    %v710 = vsel %vm708, %v709, %v707
    %v711 = vclz %v710
    %v712 = vsub.s32 %v711, 2
    %vm713 = vcmp.gt.s32.totalorder 0, %v712
    %v714 = vsel %vm713, 0, %v712
    %v715 = vsub.s32 32, %v714
    %v716 = vshll.u32 %v707, %v714
    %v717 = vshrl.u32 %v699, %v715
    %v718 = vor.u32 %v716, %v717
    %v719 = vsub.s32 4294967266, %v714
    %v720 = vadd.s32 %v719, 127
    %v721 = vshll.u32 %v720, 23
    %v722 = vor.u32 4788187, %v721
    %v723 = vand.u32 2147483647, %v722
    %v725 = vcvt.s32.f32 %v718
    %v726 = vmul.f32 %v725, %v723
    %v727 = vxor.u32 %v726, 2147483648
    %v728 = vsel %vm645, %v727, %v726
    %v729 = vsub.s32 4, %v705
    %v730 = vsel %vm645, %v729, %v705
    %v731 = vsel %vm644, %v119, %v728
    %v732 = vsel %vm644, 0, %v730
    %v733 = vcosq.f32.pop %v731
    %v734 = vsinq.f32.pop %v731
    %vm735 = vweird.f32 %v119
    %v736 = vadd.s32 %v732, 3
    %v737 = vand.u32 %v736, 3
    %vm738 = vcmp.lt.s32.totalorder %v737, 2
    %vm739 = vcmp.eq.s32.totalorder %v737, 0
    %v740 = vxor.u32 %v734, 2147483648
    %v741 = vsel %vm739, %v733, %v740
    %vm742 = vcmp.eq.s32.totalorder %v737, 2
    %v743 = vxor.u32 %v733, 2147483648
    %v744 = vsel %vm742, %v743, %v734
    %v745 = vsel %vm738, %v741, %v744
    %v746 = vsel %vm735, nan, %v745
    %v747 = vand.u32 2147483647, %v123
    %vm748 = vcmp.le.f32.partialorder %v747, 0.7853982
    %vm749 = vcmp.lt.s32.totalorder %v123, 0
    %v750 = vand.u32 %v123, 2139095040
    %v751 = vshrl.u32 %v750, 23
    %v752 = vsub.s32 %v751, 127
    %v753 = vand.u32 2147483647, %v123
    %v754 = vand.u32 %v753, 8388607
    %v755 = vor.u32 %v754, 8388608
    %v756 = vsub.s32 0, %v755
    %v757 = vadd.s32 %v752, 1
    %vm758 = vcmp.gt.s32.totalorder %v757, 0
    %v759 = vsel %vm758, %v757, 0
    %v760 = vshrl.u32 %v759, 5
    %v761 = vand.u32 %v759, 31
    %v762 = vsub.s32 32, %v761
    %v763 = vshrl.u32 683565275, %v762
    %v764 = vshll.u32 683565275, %v761
    %v765 = vshrl.u32 2475754826, %v762
    %v766 = vor.u32 %v764, %v765
    %v767 = vshll.u32 2475754826, %v761
    %v768 = vshrl.u32 2131351028, %v762
    %v769 = vor.u32 %v767, %v768
    %v770 = vshll.u32 2131351028, %v761
    %v771 = vshrl.u32 2102212464, %v762
    %v772 = vor.u32 %v770, %v771
    %v773 = vshll.u32 2102212464, %v761
    %v774 = vshrl.u32 920167782, %v762
    %v775 = vor.u32 %v773, %v774
    %v776 = vshll.u32 920167782, %v761
    %v777 = vshrl.u32 1326507024, %v762
    %v778 = vor.u32 %v776, %v777
    %vm779 = vcmp.lt.s32.totalorder %v760, 1
    %vm780 = vcmp.lt.s32.totalorder %v760, 2
    %vm781 = vcmp.lt.s32.totalorder %v760, 3
    %vm782 = vcmp.lt.s32.totalorder %v760, 4
    %v783 = vsel %vm779, %v763, %v766
    %v784 = vsel %vm782, %v772, 2102212464
    %v785 = vsel %vm781, %v769, %v784
    %v786 = vsel %vm780, %v783, %v785
    %v787 = vsel %vm779, %v766, %v769
    %v788 = vsel %vm782, %v775, 920167782
    %v789 = vsel %vm781, %v772, %v788
    %v790 = vsel %vm780, %v787, %v789
    %v791 = vsel %vm779, %v769, %v772
    %v792 = vsel %vm782, %v778, 1326507024
    %v793 = vsel %vm781, %v775, %v792
    %v794 = vsel %vm780, %v791, %v793
    %v795 = vshll.u32 %v755, 8
    %v796 = vmul.u32.u64.compose %v795, %v794
    %v797 = vextract.low.u32 %v796
    %v798 = vextract.high.u32 %v796
    %v799 = vmul.u32.u64.compose %v795, %v790
    %v800 = vextract.low.u32 %v799
    %v801 = vextract.high.u32 %v799
    %v802 = vmul.u32 %v795, %v786
    %v803 = vadd.s32 %v798, %v800
    %vm804 = vc.u32 %v798, %v800
    %v805 = vadd.s32 %v801, 1
    %v806 = vsel %vm804, %v805, %v801
    %v807 = vadd.s32 %v802, %v806
    %v808 = vadd.s32 %v807, 536870912
    %v809 = vshrl.u32 %v808, 30
    %v810 = vshll.u32 %v809, 30
    %v811 = vsub.s32 %v807, %v810
    %vm812 = vcmp.lt.s32.totalorder %v811, 0
    %v813 = vsub.s32 0, %v811
    %v814 = vsel %vm812, %v813, %v811
    %v815 = vclz %v814
    %v816 = vsub.s32 %v815, 2
    %vm817 = vcmp.gt.s32.totalorder 0, %v816
    %v818 = vsel %vm817, 0, %v816
    %v819 = vsub.s32 32, %v818
    %v820 = vshll.u32 %v811, %v818
    %v821 = vshrl.u32 %v803, %v819
    %v822 = vor.u32 %v820, %v821
    %v823 = vsub.s32 4294967266, %v818
    %v824 = vadd.s32 %v823, 127
    %v825 = vshll.u32 %v824, 23
    %v826 = vor.u32 4788187, %v825
    %v827 = vand.u32 2147483647, %v826
    %v829 = vcvt.s32.f32 %v822
    %v830 = vmul.f32 %v829, %v827
    %v831 = vxor.u32 %v830, 2147483648
    %v832 = vsel %vm749, %v831, %v830
    %v833 = vsub.s32 4, %v809
    %v834 = vsel %vm749, %v833, %v809
    %v835 = vsel %vm748, %v123, %v832
    %v836 = vsel %vm748, 0, %v834
    %v837 = vcosq.f32.pop %v835
    %v838 = vsinq.f32.pop %v835
    %vm839 = vweird.f32 %v123
    %v840 = vadd.s32 %v836, 3
    %v841 = vand.u32 %v840, 3
    %vm842 = vcmp.lt.s32.totalorder %v841, 2
    %vm843 = vcmp.eq.s32.totalorder %v841, 0
    %v844 = vxor.u32 %v838, 2147483648
    %v845 = vsel %vm843, %v837, %v844
    %vm846 = vcmp.eq.s32.totalorder %v841, 2
    %v847 = vxor.u32 %v837, 2147483648
    %v848 = vsel %vm846, %v847, %v838
    %v849 = vsel %vm842, %v845, %v848
    %v850 = vsel %vm839, nan, %v849
    %v851 = vand.u32 2147483647, %v125
    %vm852 = vcmp.le.f32.partialorder %v851, 0.7853982
    %vm853 = vcmp.lt.s32.totalorder %v125, 0
    %v854 = vand.u32 %v125, 2139095040
    %v855 = vshrl.u32 %v854, 23
    %v856 = vsub.s32 %v855, 127
    %v857 = vand.u32 2147483647, %v125
    %v858 = vand.u32 %v857, 8388607
    %v859 = vor.u32 %v858, 8388608
    %v860 = vsub.s32 0, %v859
    %v861 = vadd.s32 %v856, 1
    %vm862 = vcmp.gt.s32.totalorder %v861, 0
    %v863 = vsel %vm862, %v861, 0
    %v864 = vshrl.u32 %v863, 5
    %v865 = vand.u32 %v863, 31
    %v866 = vsub.s32 32, %v865
    %v867 = vshrl.u32 683565275, %v866
    %v868 = vshll.u32 683565275, %v865
    %v869 = vshrl.u32 2475754826, %v866
    %v870 = vor.u32 %v868, %v869
    %v871 = vshll.u32 2475754826, %v865
    %v872 = vshrl.u32 2131351028, %v866
    %v873 = vor.u32 %v871, %v872
    %v874 = vshll.u32 2131351028, %v865
    %v875 = vshrl.u32 2102212464, %v866
    %v876 = vor.u32 %v874, %v875
    %v877 = vshll.u32 2102212464, %v865
    %v878 = vshrl.u32 920167782, %v866
    %v879 = vor.u32 %v877, %v878
    %v880 = vshll.u32 920167782, %v865
    %v881 = vshrl.u32 1326507024, %v866
    %v882 = vor.u32 %v880, %v881
    %vm883 = vcmp.lt.s32.totalorder %v864, 1
    %vm884 = vcmp.lt.s32.totalorder %v864, 2
    %vm885 = vcmp.lt.s32.totalorder %v864, 3
    %vm886 = vcmp.lt.s32.totalorder %v864, 4
    %v887 = vsel %vm883, %v867, %v870
    %v888 = vsel %vm886, %v876, 2102212464
    %v889 = vsel %vm885, %v873, %v888
    %v890 = vsel %vm884, %v887, %v889
    %v891 = vsel %vm883, %v870, %v873
    %v892 = vsel %vm886, %v879, 920167782
    %v893 = vsel %vm885, %v876, %v892
    %v894 = vsel %vm884, %v891, %v893
    %v895 = vsel %vm883, %v873, %v876
    %v896 = vsel %vm886, %v882, 1326507024
    %v897 = vsel %vm885, %v879, %v896
    %v898 = vsel %vm884, %v895, %v897
    %v899 = vshll.u32 %v859, 8
    %v900 = vmul.u32.u64.compose %v899, %v898
    %v901 = vextract.low.u32 %v900
    %v902 = vextract.high.u32 %v900
    %v903 = vmul.u32.u64.compose %v899, %v894
    %v904 = vextract.low.u32 %v903
    %v905 = vextract.high.u32 %v903
    %v906 = vmul.u32 %v899, %v890
    %v907 = vadd.s32 %v902, %v904
    %vm908 = vc.u32 %v902, %v904
    %v909 = vadd.s32 %v905, 1
    %v910 = vsel %vm908, %v909, %v905
    %v911 = vadd.s32 %v906, %v910
    %v912 = vadd.s32 %v911, 536870912
    %v913 = vshrl.u32 %v912, 30
    %v914 = vshll.u32 %v913, 30
    %v915 = vsub.s32 %v911, %v914
    %vm916 = vcmp.lt.s32.totalorder %v915, 0
    %v917 = vsub.s32 0, %v915
    %v918 = vsel %vm916, %v917, %v915
    %v919 = vclz %v918
    %v920 = vsub.s32 %v919, 2
    %vm921 = vcmp.gt.s32.totalorder 0, %v920
    %v922 = vsel %vm921, 0, %v920
    %v923 = vsub.s32 32, %v922
    %v924 = vshll.u32 %v915, %v922
    %v925 = vshrl.u32 %v907, %v923
    %v926 = vor.u32 %v924, %v925
    %v927 = vsub.s32 4294967266, %v922
    %v928 = vadd.s32 %v927, 127
    %v929 = vshll.u32 %v928, 23
    %v930 = vor.u32 4788187, %v929
    %v931 = vand.u32 2147483647, %v930
    %v933 = vcvt.s32.f32 %v926
    %v934 = vmul.f32 %v933, %v931
    %v935 = vxor.u32 %v934, 2147483648
    %v936 = vsel %vm853, %v935, %v934
    %v937 = vsub.s32 4, %v913
    %v938 = vsel %vm853, %v937, %v913
    %v939 = vsel %vm852, %v125, %v936
    %v940 = vsel %vm852, 0, %v938
    %v941 = vcosq.f32.pop %v939
    %v942 = vsinq.f32.pop %v939
    %vm943 = vweird.f32 %v125
    %v944 = vadd.s32 %v940, 3
    %v945 = vand.u32 %v944, 3
    %vm946 = vcmp.lt.s32.totalorder %v945, 2
    %vm947 = vcmp.eq.s32.totalorder %v945, 0
    %v948 = vxor.u32 %v942, 2147483648
    %v949 = vsel %vm947, %v941, %v948
    %vm950 = vcmp.eq.s32.totalorder %v945, 2
    %v951 = vxor.u32 %v941, 2147483648
    %v952 = vsel %vm950, %v951, %v942
    %v953 = vsel %vm946, %v949, %v952
    %v954 = vsel %vm943, nan, %v953
    %v955 = vld [vmem:[%s2] sm:$0xff]
    %v956 = vld [vmem:[%s2 + $0x8] sm:$0xff]
    %v957 = vld [vmem:[%s2 + $0x10] sm:$0xff]
    %v958 = vld [vmem:[%s2 + $0x18] sm:$0xff]
    %v959 = vld [vmem:[%s3] sm:$0xff]
    %v960 = vld [vmem:[%s3 + $0x8] sm:$0xff]
    %v961 = vld [vmem:[%s3 + $0x10] sm:$0xff]
    %v962 = vld [vmem:[%s3 + $0x18] sm:$0xff]
    %vm963 = vcmask 130048
    %v965 = vsel %vm963, %v959, 0
    %v968 = vsel %vm963, %v960, 0
    %v971 = vsel %vm963, %v961, 0
    %v974 = vsel %vm963, %v962, 0
    %976 = vmatprep.subr.mxu0 %v746
    %977 = vmatpush1.msra.mxu0 %v642
    %978 = vmatprep.subr.mxu0 %v954
    %979 = vmatpush1.msra.mxu0 %v850
    %980 = vmatprep.subr.mxu0 0.0
    %981 = vmatpush1.msra.mxu0 0.0
    %982 = vmatprep.subr.mxu0 0.0
    %983 = vmatpush1.msra.mxu0 0.0
    %984 = vmatprep.subr.mxu0 0.0
    %985 = vmatpush1.msra.mxu0 0.0
    %986 = vmatprep.subr.mxu0 0.0
    %987 = vmatpush1.msra.mxu0 0.0
    %988 = vmatprep.subr.mxu0 0.0
    %989 = vmatpush1.msra.mxu0 0.0
    %990 = vmatprep.subr.mxu0 0.0
    %991 = vmatpush1.msra.mxu0 0.0
    %992 = vmatprep.subr.mxu0 0.0
    %993 = vmatpush1.msra.mxu0 0.0
    %994 = vmatprep.subr.mxu0 0.0
    %995 = vmatpush1.msra.mxu0 0.0
    %996 = vmatprep.subr.mxu0 0.0
    %997 = vmatpush1.msra.mxu0 0.0
    %998 = vmatprep.subr.mxu0 0.0
    %999 = vmatpush1.msra.mxu0 0.0
    %1000 = vmatprep.subr.mxu0 0.0
    %1001 = vmatpush1.msra.mxu0 0.0
    %1002 = vmatprep.subr.mxu0 0.0
    %1003 = vmatpush1.msra.mxu0 0.0
    %1004 = vmatprep.subr.mxu0 0.0
    %1005 = vmatpush1.msra.mxu0 0.0
    %1006 = vmatprep.subr.mxu0 0.0
    %1007 = vmatpush1.msra.mxu0 0.0
    %1008 = vmatprep.subr.mxu0 0.0
    %1009 = vmatpush1.msra.mxu0 0.0
    %1010 = vmatprep.subr.mxu0 0.0
    %1011 = vmatpush1.msra.mxu0 0.0
    %1012 = vmatprep.subr.mxu0 0.0
    %1013 = vmatpush1.msra.mxu0 0.0
    %1014 = vmatprep.subr.mxu0 0.0
    %1015 = vmatpush1.msra.mxu0 0.0
    %1016 = vmatprep.subr.mxu0 0.0
    %1017 = vmatpush1.msra.mxu0 0.0
    %1018 = vmatprep.subr.mxu0 0.0
    %1019 = vmatpush1.msra.mxu0 0.0
    %1020 = vmatprep.subr.mxu0 0.0
    %1021 = vmatpush1.msra.mxu0 0.0
    %1022 = vmatprep.subr.mxu0 0.0
    %1023 = vmatpush1.msra.mxu0 0.0
    %1024 = vmatprep.subr.mxu0 0.0
    %1025 = vmatpush1.msra.mxu0 0.0
    %1026 = vmatprep.subr.mxu0 0.0
    %1027 = vmatpush1.msra.mxu0 0.0
    %1028 = vmatprep.subr.mxu0 0.0
    %1029 = vmatpush1.msra.mxu0 0.0
    %1030 = vmatprep.subr.mxu0 0.0
    %1031 = vmatpush1.msra.mxu0 0.0
    %1032 = vmatprep.subr.mxu0 0.0
    %1033 = vmatpush1.msra.mxu0 0.0
    %1034 = vmatprep.subr.mxu0 0.0
    %1035 = vmatpush1.msra.mxu0 0.0
    %1036 = vmatprep.subr.mxu0 0.0
    %1037 = vmatpush1.msra.mxu0 0.0
    %1038 = vmatprep.subr.mxu0 0.0
    %1039 = vmatpush1.msra.mxu0 0.0
    %1040 = vmatprep.mubr.f32.mxu0 0.0
    %1041 = vmatmul.mubr.f32.gmra.mrb[0].mxu0 %v965
    %v1042 = vpop.f32.mrb[0].mxu0
    %v1043 = vadd.f32 0.0, %v1042
    %v1044 = vpop.f32.mrb[0].mxu0
    %v1045 = vadd.f32 0.0, %v1044
    %1046 = vmatprep.mubr.f32.mxu0 0.0
    %1047 = vmatmul.mubr.f32.gmra.mrb[0].mxu0 %v968
    %v1048 = vpop.f32.mrb[0].mxu0
    %v1049 = vadd.f32 0.0, %v1048
    %v1050 = vpop.f32.mrb[0].mxu0
    %v1051 = vadd.f32 0.0, %v1050
    %1052 = vmatprep.mubr.f32.mxu0 0.0
    %1053 = vmatmul.mubr.f32.gmra.mrb[0].mxu0 %v971
    %v1054 = vpop.f32.mrb[0].mxu0
    %v1055 = vadd.f32 0.0, %v1054
    %v1056 = vpop.f32.mrb[0].mxu0
    %v1057 = vadd.f32 0.0, %v1056
    %1058 = vmatprep.mubr.f32.mxu0 0.0
    %1059 = vmatmul.mubr.f32.gmra.mrb[0].mxu0 %v974
    %v1060 = vpop.f32.mrb[0].mxu0
    %v1061 = vadd.f32 0.0, %v1060
    %v1062 = vpop.f32.mrb[0].mxu0
    %v1063 = vadd.f32 0.0, %v1062
    %1064 = vdwg.mxu0
    %v1066 = vsel %vm963, %v955, 0
    %v1069 = vsel %vm963, %v956, 0
    %v1072 = vsel %vm963, %v957, 0
    %v1075 = vsel %vm963, %v958, 0
    %1077 = vmatprep.subr.mxu0 %v332
    %1078 = vmatpush1.msra.mxu0 %v229
    %1079 = vmatprep.subr.mxu0 %v538
    %1080 = vmatpush1.msra.mxu0 %v435
    %1081 = vmatprep.subr.mxu0 0.0
    %1082 = vmatpush1.msra.mxu0 0.0
    %1083 = vmatprep.subr.mxu0 0.0
    %1084 = vmatpush1.msra.mxu0 0.0
    %1085 = vmatprep.subr.mxu0 0.0
    %1086 = vmatpush1.msra.mxu0 0.0
    %1087 = vmatprep.subr.mxu0 0.0
    %1088 = vmatpush1.msra.mxu0 0.0
    %1089 = vmatprep.subr.mxu0 0.0
    %1090 = vmatpush1.msra.mxu0 0.0
    %1091 = vmatprep.subr.mxu0 0.0
    %1092 = vmatpush1.msra.mxu0 0.0
    %1093 = vmatprep.subr.mxu0 0.0
    %1094 = vmatpush1.msra.mxu0 0.0
    %1095 = vmatprep.subr.mxu0 0.0
    %1096 = vmatpush1.msra.mxu0 0.0
    %1097 = vmatprep.subr.mxu0 0.0
    %1098 = vmatpush1.msra.mxu0 0.0
    %1099 = vmatprep.subr.mxu0 0.0
    %1100 = vmatpush1.msra.mxu0 0.0
    %1101 = vmatprep.subr.mxu0 0.0
    %1102 = vmatpush1.msra.mxu0 0.0
    %1103 = vmatprep.subr.mxu0 0.0
    %1104 = vmatpush1.msra.mxu0 0.0
    %1105 = vmatprep.subr.mxu0 0.0
    %1106 = vmatpush1.msra.mxu0 0.0
    %1107 = vmatprep.subr.mxu0 0.0
    %1108 = vmatpush1.msra.mxu0 0.0
    %1109 = vmatprep.subr.mxu0 0.0
    %1110 = vmatpush1.msra.mxu0 0.0
    %1111 = vmatprep.subr.mxu0 0.0
    %1112 = vmatpush1.msra.mxu0 0.0
    %1113 = vmatprep.subr.mxu0 0.0
    %1114 = vmatpush1.msra.mxu0 0.0
    %1115 = vmatprep.subr.mxu0 0.0
    %1116 = vmatpush1.msra.mxu0 0.0
    %1117 = vmatprep.subr.mxu0 0.0
    %1118 = vmatpush1.msra.mxu0 0.0
    %1119 = vmatprep.subr.mxu0 0.0
    %1120 = vmatpush1.msra.mxu0 0.0
    %1121 = vmatprep.subr.mxu0 0.0
    %1122 = vmatpush1.msra.mxu0 0.0
    %1123 = vmatprep.subr.mxu0 0.0
    %1124 = vmatpush1.msra.mxu0 0.0
    %1125 = vmatprep.subr.mxu0 0.0
    %1126 = vmatpush1.msra.mxu0 0.0
    %1127 = vmatprep.subr.mxu0 0.0
    %1128 = vmatpush1.msra.mxu0 0.0
    %1129 = vmatprep.subr.mxu0 0.0
    %1130 = vmatpush1.msra.mxu0 0.0
    %1131 = vmatprep.subr.mxu0 0.0
    %1132 = vmatpush1.msra.mxu0 0.0
    %1133 = vmatprep.subr.mxu0 0.0
    %1134 = vmatpush1.msra.mxu0 0.0
    %1135 = vmatprep.subr.mxu0 0.0
    %1136 = vmatpush1.msra.mxu0 0.0
    %1137 = vmatprep.subr.mxu0 0.0
    %1138 = vmatpush1.msra.mxu0 0.0
    %1139 = vmatprep.subr.mxu0 0.0
    %1140 = vmatpush1.msra.mxu0 0.0
    %1141 = vmatprep.mubr.f32.mxu0 0.0
    %1142 = vmatmul.mubr.f32.gmra.mrb[0].mxu0 %v1066
    %v1143 = vpop.f32.mrb[0].mxu0
    %v1144 = vadd.f32 %v1043, %v1143
    %v1145 = vpop.f32.mrb[0].mxu0
    %v1146 = vadd.f32 %v1045, %v1145
    %1147 = vmatprep.mubr.f32.mxu0 0.0
    %1148 = vmatmul.mubr.f32.gmra.mrb[0].mxu0 %v1069
    %v1149 = vpop.f32.mrb[0].mxu0
    %v1150 = vadd.f32 %v1049, %v1149
    %v1151 = vpop.f32.mrb[0].mxu0
    %v1152 = vadd.f32 %v1051, %v1151
    %1153 = vmatprep.mubr.f32.mxu0 0.0
    %1154 = vmatmul.mubr.f32.gmra.mrb[0].mxu0 %v1072
    %v1155 = vpop.f32.mrb[0].mxu0
    %v1156 = vadd.f32 %v1055, %v1155
    %v1157 = vpop.f32.mrb[0].mxu0
    %v1158 = vadd.f32 %v1057, %v1157
    %1159 = vmatprep.mubr.f32.mxu0 0.0
    %1160 = vmatmul.mubr.f32.gmra.mrb[0].mxu0 %v1075
    %v1161 = vpop.f32.mrb[0].mxu0
    %v1162 = vadd.f32 %v1061, %v1161
    %v1163 = vpop.f32.mrb[0].mxu0
    %v1164 = vadd.f32 %v1063, %v1163
    %1165 = vdwg.mxu0
    %v1166 = vld [vmem:[%s4] sm:$0xff]
    %v1167 = vld [vmem:[%s4 + $0x8] sm:$0xff]
    %v1168 = vld [vmem:[%s4 + $0x10] sm:$0xff]
    %v1169 = vld [vmem:[%s4 + $0x18] sm:$0xff]
    %1171 = vset.pattern.permute.xlu0 0
    %1172 = vperm.xlu0 %1171, %v1166
    %v1173 = vpop.permute.xlu0 %1172
    %1176 = vset.pattern.permute.xlu0 0
    %1177 = vperm.xlu0 %1176, %v1167
    %v1178 = vpop.permute.xlu0 %1177
    %1181 = vset.pattern.permute.xlu0 0
    %1182 = vperm.xlu0 %1181, %v1168
    %v1183 = vpop.permute.xlu0 %1182
    %1186 = vset.pattern.permute.xlu0 0
    %1187 = vperm.xlu0 %1186, %v1169
    %v1188 = vpop.permute.xlu0 %1187
    %v1190 = vadd.f32 %v1144, %v1173
    %v1191 = vadd.f32 %v1146, %v1173
    %v1192 = vadd.f32 %v1150, %v1178
    %v1193 = vadd.f32 %v1152, %v1178
    %v1194 = vadd.f32 %v1156, %v1183
    %v1195 = vadd.f32 %v1158, %v1183
    %v1196 = vadd.f32 %v1162, %v1188
    %v1197 = vadd.f32 %v1164, %v1188
    %v1198 = vmax.f32 %v1190, 0.0
    %v1199 = vmax.f32 %v1191, 0.0
    %v1200 = vmax.f32 %v1192, 0.0
    %v1201 = vmax.f32 %v1193, 0.0
    %v1202 = vmax.f32 %v1194, 0.0
    %v1203 = vmax.f32 %v1195, 0.0
    %v1204 = vmax.f32 %v1196, 0.0
    %v1205 = vmax.f32 %v1197, 0.0
    %v1206 = vld [vmem:[%s5] sm:$0xff]
    %v1207 = vld [vmem:[%s5 + $0x8] sm:$0xff]
    %v1208 = vld [vmem:[%s5 + $0x10] sm:$0xff]
    %v1209 = vld [vmem:[%s5 + $0x18] sm:$0xff]
    %v1210 = vld [vmem:[%s6] sm:$0xff]
    %v1211 = vld [vmem:[%s6 + $0x8] sm:$0xff]
    %v1212 = vld [vmem:[%s6 + $0x10] sm:$0xff]
    %v1213 = vld [vmem:[%s6 + $0x18] sm:$0xff]
    %1215 = vset.pattern.permute.xlu0 0
    %1216 = vperm.xlu0 %1215, %v1210
    %v1217 = vpop.permute.xlu0 %1216
    %1220 = vset.pattern.permute.xlu0 0
    %1221 = vperm.xlu0 %1220, %v1211
    %v1222 = vpop.permute.xlu0 %1221
    %1225 = vset.pattern.permute.xlu0 0
    %1226 = vperm.xlu0 %1225, %v1212
    %v1227 = vpop.permute.xlu0 %1226
    %1230 = vset.pattern.permute.xlu0 0
    %1231 = vperm.xlu0 %1230, %v1213
    %v1232 = vpop.permute.xlu0 %1231
    %vm1234 = vcmask 261120
    %v1236 = vsel %vm1234, %v1206, 0
    %v1239 = vsel %vm1234, %v1207, 0
    %v1242 = vsel %vm1234, %v1208, 0
    %v1245 = vsel %vm1234, %v1209, 0
    %1247 = vmatprep.subr.mxu0 %v1199
    %1248 = vmatpush1.msra.mxu0 %v1198
    %1249 = vmatprep.subr.mxu0 %v1201
    %1250 = vmatpush1.msra.mxu0 %v1200
    %1251 = vmatprep.subr.mxu0 %v1203
    %1252 = vmatpush1.msra.mxu0 %v1202
    %1253 = vmatprep.subr.mxu0 %v1205
    %1254 = vmatpush1.msra.mxu0 %v1204
    %1255 = vmatprep.subr.mxu0 0.0
    %1256 = vmatpush1.msra.mxu0 0.0
    %1257 = vmatprep.subr.mxu0 0.0
    %1258 = vmatpush1.msra.mxu0 0.0
    %1259 = vmatprep.subr.mxu0 0.0
    %1260 = vmatpush1.msra.mxu0 0.0
    %1261 = vmatprep.subr.mxu0 0.0
    %1262 = vmatpush1.msra.mxu0 0.0
    %1263 = vmatprep.subr.mxu0 0.0
    %1264 = vmatpush1.msra.mxu0 0.0
    %1265 = vmatprep.subr.mxu0 0.0
    %1266 = vmatpush1.msra.mxu0 0.0
    %1267 = vmatprep.subr.mxu0 0.0
    %1268 = vmatpush1.msra.mxu0 0.0
    %1269 = vmatprep.subr.mxu0 0.0
    %1270 = vmatpush1.msra.mxu0 0.0
    %1271 = vmatprep.subr.mxu0 0.0
    %1272 = vmatpush1.msra.mxu0 0.0
    %1273 = vmatprep.subr.mxu0 0.0
    %1274 = vmatpush1.msra.mxu0 0.0
    %1275 = vmatprep.subr.mxu0 0.0
    %1276 = vmatpush1.msra.mxu0 0.0
    %1277 = vmatprep.subr.mxu0 0.0
    %1278 = vmatpush1.msra.mxu0 0.0
    %1279 = vmatprep.subr.mxu0 0.0
    %1280 = vmatpush1.msra.mxu0 0.0
    %1281 = vmatprep.subr.mxu0 0.0
    %1282 = vmatpush1.msra.mxu0 0.0
    %1283 = vmatprep.subr.mxu0 0.0
    %1284 = vmatpush1.msra.mxu0 0.0
    %1285 = vmatprep.subr.mxu0 0.0
    %1286 = vmatpush1.msra.mxu0 0.0
    %1287 = vmatprep.subr.mxu0 0.0
    %1288 = vmatpush1.msra.mxu0 0.0
    %1289 = vmatprep.subr.mxu0 0.0
    %1290 = vmatpush1.msra.mxu0 0.0
    %1291 = vmatprep.subr.mxu0 0.0
    %1292 = vmatpush1.msra.mxu0 0.0
    %1293 = vmatprep.subr.mxu0 0.0
    %1294 = vmatpush1.msra.mxu0 0.0
    %1295 = vmatprep.subr.mxu0 0.0
    %1296 = vmatpush1.msra.mxu0 0.0
    %1297 = vmatprep.subr.mxu0 0.0
    %1298 = vmatpush1.msra.mxu0 0.0
    %1299 = vmatprep.subr.mxu0 0.0
    %1300 = vmatpush1.msra.mxu0 0.0
    %1301 = vmatprep.subr.mxu0 0.0
    %1302 = vmatpush1.msra.mxu0 0.0
    %1303 = vmatprep.subr.mxu0 0.0
    %1304 = vmatpush1.msra.mxu0 0.0
    %1305 = vmatprep.subr.mxu0 0.0
    %1306 = vmatpush1.msra.mxu0 0.0
    %1307 = vmatprep.subr.mxu0 0.0
    %1308 = vmatpush1.msra.mxu0 0.0
    %1309 = vmatprep.subr.mxu0 0.0
    %1310 = vmatpush1.msra.mxu0 0.0
    %1311 = vmatprep.mubr.f32.mxu0 0.0
    %1312 = vmatmul.mubr.f32.gmra.mrb[0].mxu0 %v1236
    %v1313 = vpop.f32.mrb[0].mxu0
    %v1314 = vadd.f32 %v1217, %v1313
    %v1315 = vpop.f32.mrb[0].mxu0
    %v1316 = vadd.f32 %v1217, %v1315
    %1317 = vmatprep.mubr.f32.mxu0 0.0
    %1318 = vmatmul.mubr.f32.gmra.mrb[0].mxu0 %v1239
    %v1319 = vpop.f32.mrb[0].mxu0
    %v1320 = vadd.f32 %v1222, %v1319
    %v1321 = vpop.f32.mrb[0].mxu0
    %v1322 = vadd.f32 %v1222, %v1321
    %1323 = vmatprep.mubr.f32.mxu0 0.0
    %1324 = vmatmul.mubr.f32.gmra.mrb[0].mxu0 %v1242
    %v1325 = vpop.f32.mrb[0].mxu0
    %v1326 = vadd.f32 %v1227, %v1325
    %v1327 = vpop.f32.mrb[0].mxu0
    %v1328 = vadd.f32 %v1227, %v1327
    %1329 = vmatprep.mubr.f32.mxu0 0.0
    %1330 = vmatmul.mubr.f32.gmra.mrb[0].mxu0 %v1245
    %v1331 = vpop.f32.mrb[0].mxu0
    %v1332 = vadd.f32 %v1232, %v1331
    %v1333 = vpop.f32.mrb[0].mxu0
    %v1334 = vadd.f32 %v1232, %v1333
    %1335 = vdwg.mxu0
    %v1336 = vmax.f32 %v1314, 0.0
    %v1337 = vmax.f32 %v1316, 0.0
    %v1338 = vmax.f32 %v1320, 0.0
    %v1339 = vmax.f32 %v1322, 0.0
    %v1340 = vmax.f32 %v1326, 0.0
    %v1341 = vmax.f32 %v1328, 0.0
    %v1342 = vmax.f32 %v1332, 0.0
    %v1343 = vmax.f32 %v1334, 0.0
    %v1344 = vld [vmem:[%s7] sm:$0xf]
    %v1345 = vld [vmem:[%s8] sm:$0xf]
    %1347 = vset.pattern.permute.xlu0 0
    %1348 = vperm.xlu0 %1347, %v1345
    %v1349 = vpop.permute.xlu0 %1348
    %v1352 = vsel %vm1234, %v1344, 0
    %1354 = vmatprep.subr.mxu0 %v1337
    %1355 = vmatpush1.msra.mxu0 %v1336
    %1356 = vmatprep.subr.mxu0 %v1339
    %1357 = vmatpush1.msra.mxu0 %v1338
    %1358 = vmatprep.subr.mxu0 %v1341
    %1359 = vmatpush1.msra.mxu0 %v1340
    %1360 = vmatprep.subr.mxu0 %v1343
    %1361 = vmatpush1.msra.mxu0 %v1342
    %1362 = vmatprep.subr.mxu0 0.0
    %1363 = vmatpush1.msra.mxu0 0.0
    %1364 = vmatprep.subr.mxu0 0.0
    %1365 = vmatpush1.msra.mxu0 0.0
    %1366 = vmatprep.subr.mxu0 0.0
    %1367 = vmatpush1.msra.mxu0 0.0
    %1368 = vmatprep.subr.mxu0 0.0
    %1369 = vmatpush1.msra.mxu0 0.0
    %1370 = vmatprep.subr.mxu0 0.0
    %1371 = vmatpush1.msra.mxu0 0.0
    %1372 = vmatprep.subr.mxu0 0.0
    %1373 = vmatpush1.msra.mxu0 0.0
    %1374 = vmatprep.subr.mxu0 0.0
    %1375 = vmatpush1.msra.mxu0 0.0
    %1376 = vmatprep.subr.mxu0 0.0
    %1377 = vmatpush1.msra.mxu0 0.0
    %1378 = vmatprep.subr.mxu0 0.0
    %1379 = vmatpush1.msra.mxu0 0.0
    %1380 = vmatprep.subr.mxu0 0.0
    %1381 = vmatpush1.msra.mxu0 0.0
    %1382 = vmatprep.subr.mxu0 0.0
    %1383 = vmatpush1.msra.mxu0 0.0
    %1384 = vmatprep.subr.mxu0 0.0
    %1385 = vmatpush1.msra.mxu0 0.0
    %1386 = vmatprep.subr.mxu0 0.0
    %1387 = vmatpush1.msra.mxu0 0.0
    %1388 = vmatprep.subr.mxu0 0.0
    %1389 = vmatpush1.msra.mxu0 0.0
    %1390 = vmatprep.subr.mxu0 0.0
    %1391 = vmatpush1.msra.mxu0 0.0
    %1392 = vmatprep.subr.mxu0 0.0
    %1393 = vmatpush1.msra.mxu0 0.0
    %1394 = vmatprep.subr.mxu0 0.0
    %1395 = vmatpush1.msra.mxu0 0.0
    %1396 = vmatprep.subr.mxu0 0.0
    %1397 = vmatpush1.msra.mxu0 0.0
    %1398 = vmatprep.subr.mxu0 0.0
    %1399 = vmatpush1.msra.mxu0 0.0
    %1400 = vmatprep.subr.mxu0 0.0
    %1401 = vmatpush1.msra.mxu0 0.0
    %1402 = vmatprep.subr.mxu0 0.0
    %1403 = vmatpush1.msra.mxu0 0.0
    %1404 = vmatprep.subr.mxu0 0.0
    %1405 = vmatpush1.msra.mxu0 0.0
    %1406 = vmatprep.subr.mxu0 0.0
    %1407 = vmatpush1.msra.mxu0 0.0
    %1408 = vmatprep.subr.mxu0 0.0
    %1409 = vmatpush1.msra.mxu0 0.0
    %1410 = vmatprep.subr.mxu0 0.0
    %1411 = vmatpush1.msra.mxu0 0.0
    %1412 = vmatprep.subr.mxu0 0.0
    %1413 = vmatpush1.msra.mxu0 0.0
    %1414 = vmatprep.subr.mxu0 0.0
    %1415 = vmatpush1.msra.mxu0 0.0
    %1416 = vmatprep.subr.mxu0 0.0
    %1417 = vmatpush1.msra.mxu0 0.0
    %1418 = vmatprep.mubr.f32.mxu0 0.0
    %1419 = vmatmul.mubr.f32.gmra.mrb[0].mxu0 %v1352
    %v1420 = vpop.f32.mrb[0].mxu0
    %v1421 = vadd.f32 %v1349, %v1420
    %v1422 = vpop.f32.mrb[0].mxu0
    %v1423 = vadd.f32 %v1349, %v1422
    %1424 = vdwg.mxu0
    %v1427 = vcombine.low %v1421, %v1423
    %1429 = vst [vmem:[#allocation2] sm:$0xff] %v1427
    // Predicated region
    $region38: #{tpu_custom_call.1} parent=1 // pred_check
      _
    $region39: #{tpu_custom_call.1} parent=1 // pred_check_branch
      %1431 = sbr.rel (0) target = $region41
    $region40: #{tpu_custom_call.1} parent=1 // pred_region
      %s1433 = ssub.s32 128, 128
      %1434 = vsyncadd [#allocation3], %s1433
      %s1436 = sshll.u32 [#allocation2], 4
      %s1437 = int_to_ptr.vmem [resolvable:$true] %s1436
      %1439 = dma.vmem_to_hbm [thread:$0]  %s1437, 128, %s9, [#allocation3]
    $region41: #{tpu_custom_call.1} parent=1 // pred_fallthru
      _
    // Predicated region
    $region42: #{tpu_custom_call.1} parent=1 // pred_check
      _
    $region43: #{tpu_custom_call.1} parent=1 // pred_check_branch
      %1441 = sbr.rel (0) target = $region45
    $region44: #{tpu_custom_call.1} parent=1 // pred_region
      %1442 = dma.done [#allocation3], 128
    $region45: #{tpu_custom_call.1} parent=1 // pred_fallthru
      _
    %1443 = vsyncpa [#allocation3], 1

</llo_original>
